<compile_context>
chip_gen: v7x
topology: tpu7x:2x2x1
jax: 0.10.0
libtpu: 0.0.40
codegen_flags: <defaults>
</compile_context>

<pallas_src>
import jax
import jax.numpy as jnp
from jax.experimental import pallas as pl
from jax.experimental.pallas import tpu as pltpu


_KH = _KW = 5
_STRIDE = 2
_PAD = 2


def _conv_out(n):
    return (n + 2 * _PAD - _KH) // _STRIDE + 1


def _pick_row_block(rows):
    # 256-row blocks fill the 256-deep MXU on v6e/v7x; below 512 rows fall back to 128 so
    # the grid keeps >=2 steps and v7x's two TensorCores both get work ("parallel" axis).
    return 256 if rows >= 512 else 128


def _stable_sigmoid(x):
    # exp() only sees non-positive arguments (EUP), reciprocal is approx (EUP) -> the VPU
    # only does the cheap select/multiply.
    z = jnp.exp(-jnp.abs(x))
    inv = pl.reciprocal(1.0 + z, approx=True)
    return jnp.where(x >= 0, inv, z * inv)


# ---------------------------------------------------------------------------
# Fused kernel: conv-as-matmul + Sigmoid, then Linear+Sigmoid x3, all in VMEM.
# ---------------------------------------------------------------------------
def _fused_forward_kernel(p_ref, wc_ref, bc_ref, w1_ref, b1_ref,
                          w2_ref, b2_ref, w3t_ref, b3_ref, o_ref):
    # Conv2d(5,2,2) as a (ROW_BLOCK, 128)x(128, c) bf16 matmul, f32 accumulate.
    feat = _stable_sigmoid(
        jnp.dot(p_ref[...], wc_ref[...], preferred_element_type=jnp.float32)
        + bc_ref[...])                                                     # (RB, c) f32
    h1 = _stable_sigmoid(
        jnp.dot(feat.astype(jnp.bfloat16), w1_ref[...],
                preferred_element_type=jnp.float32) + b1_ref[...])         # (RB, 4c) f32
    h2 = _stable_sigmoid(
        jnp.dot(h1.astype(jnp.bfloat16), w2_ref[...],
                preferred_element_type=jnp.float32) + b2_ref[...])         # (RB, c) f32
    # Final Linear(c, 1) as (1,c)·h2ᵀ -> (1, RB): lane-dense logits, no (c,1)/(1,1)
    # sub-lane-width weight tiles, no masked 1-lane output stores.
    logits = jnp.einsum("oc,rc->or", w3t_ref[...], h2.astype(jnp.bfloat16),
                        preferred_element_type=jnp.float32) + b3_ref[...]  # (1, RB) f32
    o_ref[...] = _stable_sigmoid(logits).reshape(o_ref.shape)              # (1, 1, RB)


def _fused_forward(patches, params, row_block):
    rows_p, kp = patches.shape
    c = params["bc"].shape[-1]
    c4 = params["b1"].shape[-1]
    n_blk = rows_p // row_block
    const = lambda i: (0, 0)
    out = pl.pallas_call(
        _fused_forward_kernel,
        out_shape=jax.ShapeDtypeStruct((n_blk, 1, row_block), jnp.float32),
        grid=(n_blk,),
        in_specs=[
            pl.BlockSpec((row_block, kp), lambda i: (i, 0)),  # sampled patch rows (bf16)
            pl.BlockSpec((kp, c), const),                     # conv weight (K-padded, bf16)
            pl.BlockSpec((1, c), const),                      # conv bias (f32)
            pl.BlockSpec((c, c4), const),                     # w1 (bf16)
            pl.BlockSpec((1, c4), const),                     # b1 (f32)
            pl.BlockSpec((c4, c), const),                     # w2 (bf16)
            pl.BlockSpec((1, c), const),                      # b2 (f32)
            pl.BlockSpec((1, c), const),                      # w3 stored as a row (bf16)
            pl.BlockSpec((1, 1), const),                      # b3 (f32)
        ],
        out_specs=pl.BlockSpec((1, 1, row_block), lambda i: (i, 0, 0)),
        compiler_params=pltpu.CompilerParams(
            dimension_semantics=("parallel",)),
    )(patches, params["wc"], params["bc"], params["w1"], params["b1"],
      params["w2"], params["b2"], params["w3t"], params["b3"])
    # (n_blk, 1, RB) -> (n_blk*RB, 1): lane j of block i is row i*RB + j.
    return out.reshape(n_blk * row_block, 1)


# ---------------------------------------------------------------------------
# Wrapper glue: gather ONLY the sampled 5x5xCin windows (no full im2col).
# ---------------------------------------------------------------------------
def _gather_sampled_patches(x, perm, wo):
    """Sampled im2col rows for Conv2d(k=5, s=2, p=2).

    x: (B, Cin, H, W) NCHW.  perm: (S,) flat conv-output pixel indices (h_out*Wo + w_out).
    Returns (B*S, Cin*25) patch rows, K ordered (cin, ky, kx) = torch weight flatten;
    row index = b*S + sample, matching transform2's output row ordering.
    """
    b, cin, _, _ = x.shape
    s = perm.shape[0]
    xp = jnp.pad(x, ((0, 0), (0, 0), (_PAD, _PAD), (_PAD, _PAD)))
    oy = perm // wo
    ox = perm % wo
    ry = oy[:, None] * _STRIDE + jnp.arange(_KH)[None, :]            # (S, KH)
    rx = ox[:, None] * _STRIDE + jnp.arange(_KW)[None, :]            # (S, KW)
    win = xp[:, :, ry[:, :, None], rx[:, None, :]]                   # (B, Cin, S, KH, KW)
    win = jnp.transpose(win, (0, 2, 1, 3, 4))                        # (B, S, Cin, KH, KW)
    return win.reshape(b * s, cin * _KH * _KW)


def pada_discriminator_forward(params, pop_hr, pop_sr, key):
    b1, cin, h1, w1 = pop_hr.shape
    b2, cin2, h2, w2 = pop_sr.shape
    assert cin == cin2

    ho1, wo1 = _conv_out(h1), _conv_out(w1)
    ho2, wo2 = _conv_out(h2), _conv_out(w2)

    # transform2: random pixel sampling of the conv output.  Conv output pixel i depends
    # only on patch row i, so the sampling commutes with conv+classifier: gather the
    # sampled patch rows up front and the kernel computes exactly those rows, already in
    # torch's output row order (row = batch * S + sample, hr batches first).
    s = min(64, ho1 * wo1, ho2 * wo2)
    k1, k2 = jax.random.split(key)
    perm1 = jax.random.permutation(k1, ho1 * wo1)[:s]
    perm2 = jax.random.permutation(k2, ho2 * wo2)[:s]

    rows_hr = _gather_sampled_patches(pop_hr, perm1, wo1)            # (b1*s, cin*25)
    rows_sr = _gather_sampled_patches(pop_sr, perm2, wo2)            # (b2*s, cin*25)

    rows = (b1 + b2) * s
    k = cin * _KH * _KW
    kp = params["wc"].shape[0]
    row_block = _pick_row_block(rows)
    rows_p = ((rows + row_block - 1) // row_block) * row_block

    # K (100->128) + row padding + bf16 cast folded into a single buffer write.
    patches = (jnp.zeros((rows_p, kp), jnp.bfloat16)
               .at[:b1 * s, :k].set(rows_hr.astype(jnp.bfloat16))
               .at[b1 * s:rows, :k].set(rows_sr.astype(jnp.bfloat16)))

    x = _fused_forward(patches, params, row_block)[:rows]            # ((b1+b2)*s, 1) f32

    use_hr = jnp.concatenate(
        [jnp.ones((b1 * s, 1), jnp.float32), jnp.zeros((b2 * s, 1), jnp.float32)],
        axis=0)
    return x, use_hr


# ---------------------------------------------------------------------------
# Parameter init (weights ~ N(0, 0.01) like the torch module; kernel-ready layout)
# ---------------------------------------------------------------------------
def init_params(key, input_channel, base_channel):
    c = base_channel
    k = input_channel * _KH * _KW
    kp = ((k + 127) // 128) * 128
    keys = jax.random.split(key, 8)
    conv_w = 0.01 * jax.random.normal(keys[0], (c, input_channel, _KH, _KW), jnp.float32)
    # im2col weight (K, Cout), K order (cin, ky, kx) = torch flatten, zero-padded to 128.
    wc = jnp.zeros((kp, c), jnp.float32).at[:k].set(conv_w.reshape(c, k).T)
    return {
        "wc": wc.astype(jnp.bfloat16),
        "bc": 0.01 * jax.random.uniform(keys[1], (1, c), jnp.float32, -1.0, 1.0),
        "w1": (0.01 * jax.random.normal(keys[2], (c, 4 * c), jnp.float32)).astype(jnp.bfloat16),
        "b1": 0.01 * jax.random.uniform(keys[3], (1, 4 * c), jnp.float32, -1.0, 1.0),
        "w2": (0.01 * jax.random.normal(keys[4], (4 * c, c), jnp.float32)).astype(jnp.bfloat16),
        "b2": 0.01 * jax.random.uniform(keys[5], (1, c), jnp.float32, -1.0, 1.0),
        # Linear(c, 1) weight stored as a (1, c) row for the lane-dense final layer.
        "w3t": (0.01 * jax.random.normal(keys[6], (1, c), jnp.float32)).astype(jnp.bfloat16),
        "b3": 0.01 * jax.random.uniform(keys[7], (1, 1), jnp.float32, -1.0, 1.0),
    }


if __name__ == "__main__":
    input_channel = 4
    base_channel = 32
    B, H, W = 2, 16, 16

    root = jax.random.PRNGKey(0)
    k_param, k_hr, k_sr, k_perm = jax.random.split(root, 4)
    params = init_params(k_param, input_channel, base_channel)

    pop_hr = jax.random.normal(k_hr, (B, input_channel, H, W), jnp.float32)
    pop_sr = jax.random.normal(k_sr, (B, input_channel, H, W), jnp.float32)

    fwd = jax.jit(pada_discriminator_forward)
    x, use_hr = fwd(params, pop_hr, pop_sr, k_perm)
    x = jax.block_until_ready(x)
    use_hr = jax.block_until_ready(use_hr)

    # conv out spatial = 8x8 -> sampled_pixels = 64 -> rows = (2+2)*64 = 256
    assert x.shape == (256, 1) and use_hr.shape == (256, 1)
    assert bool(jnp.all(jnp.isfinite(x)))
    assert bool(jnp.all((x > 0.0) & (x < 1.0)))
    assert bool(jnp.all((use_hr == 0.0) | (use_hr == 1.0)))
    print("KERNEL_OK")
</pallas_src>

<mosaic_0001>
module attributes {stable_mosaic.version = 11 : i64} {
  func.func @_fused_forward_kernel(%arg0: i32, %arg1: memref<128x128xbf16, #tpu.memory_space<vmem>>, %arg2: memref<128x32xbf16, #tpu.memory_space<vmem>>, %arg3: memref<1x32xf32, #tpu.memory_space<vmem>>, %arg4: memref<32x128xbf16, #tpu.memory_space<vmem>>, %arg5: memref<1x128xf32, #tpu.memory_space<vmem>>, %arg6: memref<128x32xbf16, #tpu.memory_space<vmem>>, %arg7: memref<1x32xf32, #tpu.memory_space<vmem>>, %arg8: memref<1x32xbf16, #tpu.memory_space<vmem>>, %arg9: memref<1x1xf32, #tpu.memory_space<vmem>>, %arg10: memref<1x1x128xf32, #tpu.memory_space<vmem>>) attributes {dimension_semantics = [#tpu.dimension_semantics<parallel>], iteration_bounds = array<i64: 2>, scalar_prefetch = 0 : i64, scratch_operands = 0 : i64, tpu.core_type = #tpu.core_type<tc>, window_params = [{transform_indices = @transform_0, window_bounds = array<i64: 128, 128>}, {pipeline_mode = #tpu.pipeline_mode<synchronous>, transform_indices = @transform_1, window_bounds = array<i64: 128, 32>}, {pipeline_mode = #tpu.pipeline_mode<synchronous>, transform_indices = @transform_2, window_bounds = array<i64: 1, 32>}, {pipeline_mode = #tpu.pipeline_mode<synchronous>, transform_indices = @transform_3, window_bounds = array<i64: 32, 128>}, {pipeline_mode = #tpu.pipeline_mode<synchronous>, transform_indices = @transform_4, window_bounds = array<i64: 1, 128>}, {pipeline_mode = #tpu.pipeline_mode<synchronous>, transform_indices = @transform_5, window_bounds = array<i64: 128, 32>}, {pipeline_mode = #tpu.pipeline_mode<synchronous>, transform_indices = @transform_6, window_bounds = array<i64: 1, 32>}, {pipeline_mode = #tpu.pipeline_mode<synchronous>, transform_indices = @transform_7, window_bounds = array<i64: 1, 32>}, {pipeline_mode = #tpu.pipeline_mode<synchronous>, transform_indices = @transform_8, window_bounds = array<i64: 1, 1>}, {transform_indices = @transform_9, window_bounds = array<i64: 1, 1, 128>}]} {
    %c0 = arith.constant 0 : index
    %c0_0 = arith.constant 0 : index
    %0 = vector.load %arg1[%c0, %c0_0] : memref<128x128xbf16, #tpu.memory_space<vmem>>, vector<128x128xbf16>
    %c0_1 = arith.constant 0 : index
    %c0_2 = arith.constant 0 : index
    %1 = vector.load %arg2[%c0_1, %c0_2] : memref<128x32xbf16, #tpu.memory_space<vmem>>, vector<128x32xbf16>
    %cst = arith.constant dense<0.000000e+00> : vector<128x32xf32>
    %2 = tpu.matmul %0, %1, %cst {dimension_numbers = #tpu.dot_dimension_numbers<[1], [0], [0], [1], [0, 0, 1, 1], [], []>} : vector<128x128xbf16>, vector<128x32xbf16>, vector<128x32xf32> -> vector<128x32xf32>
    %c0_3 = arith.constant 0 : index
    %c0_4 = arith.constant 0 : index
    %3 = vector.load %arg3[%c0_3, %c0_4] : memref<1x32xf32, #tpu.memory_space<vmem>>, vector<1x32xf32>
    %4 = vector.broadcast %3 : vector<1x32xf32> to vector<128x32xf32>
    %5 = arith.addf %2, %4 : vector<128x32xf32>
    %6 = math.absf %5 : vector<128x32xf32>
    %cst_5 = arith.constant 0.000000e+00 : f32
    %7 = vector.broadcast %cst_5 : f32 to vector<128x32xf32>
    %8 = arith.subf %7, %6 : vector<128x32xf32>
    %9 = math.exp %8 : vector<128x32xf32>
    %cst_6 = arith.constant 1.000000e+00 : f32
    %10 = vector.broadcast %cst_6 : f32 to vector<128x32xf32>
    %11 = arith.addf %10, %9 : vector<128x32xf32>
    %12 = tpu.reciprocal %11 {approx = true} : vector<128x32xf32> -> vector<128x32xf32>
    %cst_7 = arith.constant 0.000000e+00 : f32
    %13 = vector.broadcast %cst_7 : f32 to vector<128x32xf32>
    %14 = arith.cmpf oge, %5, %13 : vector<128x32xf32>
    %15 = arith.mulf %9, %12 : vector<128x32xf32>
    %16 = arith.select %14, %12, %15 : vector<128x32xi1>, vector<128x32xf32>
    %17 = arith.truncf %16 : vector<128x32xf32> to vector<128x32xbf16>
    %c0_8 = arith.constant 0 : index
    %c0_9 = arith.constant 0 : index
    %18 = vector.load %arg4[%c0_8, %c0_9] : memref<32x128xbf16, #tpu.memory_space<vmem>>, vector<32x128xbf16>
    %cst_10 = arith.constant dense<0.000000e+00> : vector<128x128xf32>
    %19 = tpu.matmul %17, %18, %cst_10 {dimension_numbers = #tpu.dot_dimension_numbers<[1], [0], [0], [1], [0, 0, 1, 1], [], []>} : vector<128x32xbf16>, vector<32x128xbf16>, vector<128x128xf32> -> vector<128x128xf32>
    %c0_11 = arith.constant 0 : index
    %c0_12 = arith.constant 0 : index
    %20 = vector.load %arg5[%c0_11, %c0_12] : memref<1x128xf32, #tpu.memory_space<vmem>>, vector<1x128xf32>
    %21 = vector.broadcast %20 : vector<1x128xf32> to vector<128x128xf32>
    %22 = arith.addf %19, %21 : vector<128x128xf32>
    %23 = math.absf %22 : vector<128x128xf32>
    %cst_13 = arith.constant 0.000000e+00 : f32
    %24 = vector.broadcast %cst_13 : f32 to vector<128x128xf32>
    %25 = arith.subf %24, %23 : vector<128x128xf32>
    %26 = math.exp %25 : vector<128x128xf32>
    %cst_14 = arith.constant 1.000000e+00 : f32
    %27 = vector.broadcast %cst_14 : f32 to vector<128x128xf32>
    %28 = arith.addf %27, %26 : vector<128x128xf32>
    %29 = tpu.reciprocal %28 {approx = true} : vector<128x128xf32> -> vector<128x128xf32>
    %cst_15 = arith.constant 0.000000e+00 : f32
    %30 = vector.broadcast %cst_15 : f32 to vector<128x128xf32>
    %31 = arith.cmpf oge, %22, %30 : vector<128x128xf32>
    %32 = arith.mulf %26, %29 : vector<128x128xf32>
    %33 = arith.select %31, %29, %32 : vector<128x128xi1>, vector<128x128xf32>
    %34 = arith.truncf %33 : vector<128x128xf32> to vector<128x128xbf16>
    %c0_16 = arith.constant 0 : index
    %c0_17 = arith.constant 0 : index
    %35 = vector.load %arg6[%c0_16, %c0_17] : memref<128x32xbf16, #tpu.memory_space<vmem>>, vector<128x32xbf16>
    %cst_18 = arith.constant dense<0.000000e+00> : vector<128x32xf32>
    %36 = tpu.matmul %34, %35, %cst_18 {dimension_numbers = #tpu.dot_dimension_numbers<[1], [0], [0], [1], [0, 0, 1, 1], [], []>} : vector<128x128xbf16>, vector<128x32xbf16>, vector<128x32xf32> -> vector<128x32xf32>
    %c0_19 = arith.constant 0 : index
    %c0_20 = arith.constant 0 : index
    %37 = vector.load %arg7[%c0_19, %c0_20] : memref<1x32xf32, #tpu.memory_space<vmem>>, vector<1x32xf32>
    %38 = vector.broadcast %37 : vector<1x32xf32> to vector<128x32xf32>
    %39 = arith.addf %36, %38 : vector<128x32xf32>
    %40 = math.absf %39 : vector<128x32xf32>
    %cst_21 = arith.constant 0.000000e+00 : f32
    %41 = vector.broadcast %cst_21 : f32 to vector<128x32xf32>
    %42 = arith.subf %41, %40 : vector<128x32xf32>
    %43 = math.exp %42 : vector<128x32xf32>
    %cst_22 = arith.constant 1.000000e+00 : f32
    %44 = vector.broadcast %cst_22 : f32 to vector<128x32xf32>
    %45 = arith.addf %44, %43 : vector<128x32xf32>
    %46 = tpu.reciprocal %45 {approx = true} : vector<128x32xf32> -> vector<128x32xf32>
    %cst_23 = arith.constant 0.000000e+00 : f32
    %47 = vector.broadcast %cst_23 : f32 to vector<128x32xf32>
    %48 = arith.cmpf oge, %39, %47 : vector<128x32xf32>
    %49 = arith.mulf %43, %46 : vector<128x32xf32>
    %50 = arith.select %48, %46, %49 : vector<128x32xi1>, vector<128x32xf32>
    %c0_24 = arith.constant 0 : index
    %c0_25 = arith.constant 0 : index
    %51 = vector.load %arg8[%c0_24, %c0_25] : memref<1x32xbf16, #tpu.memory_space<vmem>>, vector<1x32xbf16>
    %52 = arith.truncf %50 : vector<128x32xf32> to vector<128x32xbf16>
    "tpu.trace_start"() <{level = 10 : i32, message = "oc,rc->or"}> : () -> ()
    %cst_26 = arith.constant dense<0.000000e+00> : vector<1x128xf32>
    %53 = tpu.matmul %51, %52, %cst_26 {dimension_numbers = #tpu.dot_dimension_numbers<[1], [1], [0], [0], [0, 0, 1, 0], [], []>} : vector<1x32xbf16>, vector<128x32xbf16>, vector<1x128xf32> -> vector<1x128xf32>
    "tpu.trace_stop"() : () -> ()
    %c0_27 = arith.constant 0 : index
    %c0_28 = arith.constant 0 : index
    %54 = vector.load %arg9[%c0_27, %c0_28] : memref<1x1xf32, #tpu.memory_space<vmem>>, vector<1x1xf32>
    %55 = vector.broadcast %54 : vector<1x1xf32> to vector<1x128xf32>
    %56 = arith.addf %53, %55 : vector<1x128xf32>
    %57 = math.absf %56 : vector<1x128xf32>
    %cst_29 = arith.constant 0.000000e+00 : f32
    %58 = vector.broadcast %cst_29 : f32 to vector<1x128xf32>
    %59 = arith.subf %58, %57 : vector<1x128xf32>
    %60 = math.exp %59 : vector<1x128xf32>
    %cst_30 = arith.constant 1.000000e+00 : f32
    %61 = vector.broadcast %cst_30 : f32 to vector<1x128xf32>
    %62 = arith.addf %61, %60 : vector<1x128xf32>
    %63 = tpu.reciprocal %62 {approx = true} : vector<1x128xf32> -> vector<1x128xf32>
    %cst_31 = arith.constant 0.000000e+00 : f32
    %64 = vector.broadcast %cst_31 : f32 to vector<1x128xf32>
    %65 = arith.cmpf oge, %56, %64 : vector<1x128xf32>
    %66 = arith.mulf %60, %63 : vector<1x128xf32>
    %67 = arith.select %65, %63, %66 : vector<1x128xi1>, vector<1x128xf32>
    %68 = vector.shape_cast %67 : vector<1x128xf32> to vector<1x1x128xf32>
    %c0_32 = arith.constant 0 : index
    %c0_33 = arith.constant 0 : index
    %c0_34 = arith.constant 0 : index
    %69 = vector.load %arg10[%c0_32, %c0_33, %c0_34] : memref<1x1x128xf32, #tpu.memory_space<vmem>>, vector<1x1x128xf32>
    tpu.vector_store %arg10[%c0_32, %c0_33, %c0_34], %68 {strides = array<i32>} : memref<1x1x128xf32, #tpu.memory_space<vmem>>, vector<1x1x128xf32>,
    return
  }
  func.func @transform_0(%arg0: i32) -> (i32, i32) {
    %c0_i32 = arith.constant 0 : i32
    %c0_i32_0 = arith.constant 0 : i32
    return %arg0, %c0_i32 : i32, i32
  }
  func.func @transform_1(%arg0: i32) -> (i32, i32) {
    %c0_i32 = arith.constant 0 : i32
    %c0_i32_0 = arith.constant 0 : i32
    %c0_i32_1 = arith.constant 0 : i32
    return %c0_i32, %c0_i32_0 : i32, i32
  }
  func.func @transform_2(%arg0: i32) -> (i32, i32) {
    %c0_i32 = arith.constant 0 : i32
    %c0_i32_0 = arith.constant 0 : i32
    %c0_i32_1 = arith.constant 0 : i32
    return %c0_i32, %c0_i32_0 : i32, i32
  }
  func.func @transform_3(%arg0: i32) -> (i32, i32) {
    %c0_i32 = arith.constant 0 : i32
    %c0_i32_0 = arith.constant 0 : i32
    %c0_i32_1 = arith.constant 0 : i32
    return %c0_i32, %c0_i32_0 : i32, i32
  }
  func.func @transform_4(%arg0: i32) -> (i32, i32) {
    %c0_i32 = arith.constant 0 : i32
    %c0_i32_0 = arith.constant 0 : i32
    %c0_i32_1 = arith.constant 0 : i32
    return %c0_i32, %c0_i32_0 : i32, i32
  }
  func.func @transform_5(%arg0: i32) -> (i32, i32) {
    %c0_i32 = arith.constant 0 : i32
    %c0_i32_0 = arith.constant 0 : i32
    %c0_i32_1 = arith.constant 0 : i32
    return %c0_i32, %c0_i32_0 : i32, i32
  }
  func.func @transform_6(%arg0: i32) -> (i32, i32) {
    %c0_i32 = arith.constant 0 : i32
    %c0_i32_0 = arith.constant 0 : i32
    %c0_i32_1 = arith.constant 0 : i32
    return %c0_i32, %c0_i32_0 : i32, i32
  }
  func.func @transform_7(%arg0: i32) -> (i32, i32) {
    %c0_i32 = arith.constant 0 : i32
    %c0_i32_0 = arith.constant 0 : i32
    %c0_i32_1 = arith.constant 0 : i32
    return %c0_i32, %c0_i32_0 : i32, i32
  }
  func.func @transform_8(%arg0: i32) -> (i32, i32) {
    %c0_i32 = arith.constant 0 : i32
    %c0_i32_0 = arith.constant 0 : i32
    %c0_i32_1 = arith.constant 0 : i32
    return %c0_i32, %c0_i32_0 : i32, i32
  }
  func.func @transform_9(%arg0: i32) -> (i32, i32, i32) {
    %c0_i32 = arith.constant 0 : i32
    %c0_i32_0 = arith.constant 0 : i32
    %c0_i32_1 = arith.constant 0 : i32
    return %arg0, %c0_i32, %c0_i32_0 : i32, i32, i32
  }
}

</mosaic_0001>

<llo_original>
// kernel: pada_discriminator_forward.1
$region0: #{pada_discriminator_forward.1}
  #allocation0 [shape = 'u32[]', space=smem, size = 0x4, offset = 0x4, fixed_abs, tag = 'smem constant byte address 0x4 - core index']
  #allocation1 [shape = 'u32[144,128]{1,0:T(1,128)}', space=vmem, size = 0x12000, scoped, tag = 'internal scratch']
  #allocation2 [shape = 'f32[1,1]{1,0:T(1,128)S(1)}', space=vmem, size = 0x200, scoped, tag = 'scoped memory for pada_discriminator_forward.1']
  %s0 = inlined_call_operand.vmem [shape: bf16[256,128], index: 0, kind: input, shape index: {}]
  %s1 = inlined_call_operand.vmem [shape: bf16[128,32], index: 1, kind: input, shape index: {}]
  %s2 = inlined_call_operand.vmem [shape: f32[1,32], index: 2, kind: input, shape index: {}]
  %s3 = inlined_call_operand.vmem [shape: bf16[32,128], index: 3, kind: input, shape index: {}]
  %s4 = inlined_call_operand.vmem [shape: f32[1,128], index: 4, kind: input, shape index: {}]
  %s5 = inlined_call_operand.vmem [shape: bf16[128,32], index: 5, kind: input, shape index: {}]
  %s6 = inlined_call_operand.vmem [shape: f32[1,32], index: 6, kind: input, shape index: {}]
  %s7 = inlined_call_operand.vmem [shape: bf16[1,32], index: 7, kind: input, shape index: {}]
  %s8 = inlined_call_operand.<no memory space> [shape: f32[1,1], index: 8, kind: input, shape index: {}]
  %s9 = inlined_call_operand.hbm [shape: f32[2,1,128], index: 9, kind: output, shape index: {}]
  %s10 = sld [smem:[#allocation0]]
  $region69: #{pada_discriminator_forward.1} parent=0
    _
  %s12 = ssub.s32 1, %s10
  %s13 = scalar_select 0, %s12, %s10
  %v14 = vstv %s8
  %15 = vst [vmem:[#allocation2] sm:$0x1] %v14
  $region1: #{pada_discriminator_forward.1} parent=0
    #allocation3 [shape = 'u8[1024]{0}', space=vmem, size = 0x400, scoped, tag = 'output window, operand 0']
    #allocation4 [shape = 's32[2]{0}', space=sflag, size = 0x8, scoped, tag = 'scoped memory for pada_discriminator_forward.1']
    %16 = vsyncpa [#allocation4], 0
    %s17 = scalar_lea.sflag [#allocation4], 1
    %18 = vsyncpa %s17, 0
    loop: start=0, step=1, limit=4
    $region2: #{pada_discriminator_forward.1} parent=1 // loop_pre_header
      _
    $region3: #{pada_discriminator_forward.1} parent=1 // loop_header
      %s20 = sphi 0, %s24
      %p21 = scmp.ge.s32.totalorder %s20, 4
      %s30 = sphi 0, %s32
      %s33 = sphi 0, %s30
      %s34 = sphi 0, %s33
      %s50 = sphi 0, %s34
      %s54 = sphi 0, %s54
      %s56 = sphi 0, %s54
      %s57 = sphi 0, %s56
      %s71 = sphi 0, %s57
      %s75 = sphi 0, %s75
      %s77 = sphi 0, %s75
      %s78 = sphi 0, %s77
      %s92 = sphi 0, %s78
      %s96 = sphi 0, %s96
      %s98 = sphi 0, %s96
      %s99 = sphi 0, %s98
      %s113 = sphi 0, %s99
      %s117 = sphi 0, %s117
      %s119 = sphi 0, %s117
      %s120 = sphi 0, %s119
      %s134 = sphi 0, %s120
      %s138 = sphi 0, %s138
      %s140 = sphi 0, %s138
      %s141 = sphi 0, %s140
      %s155 = sphi 0, %s141
      %s159 = sphi 0, %s159
      %s161 = sphi 0, %s159
      %s162 = sphi 0, %s161
      %s176 = sphi 0, %s162
      %s180 = sphi 0, %s180
      %s182 = sphi 0, %s180
      %s183 = sphi 0, %s182
      %s197 = sphi 0, %s183
      %s201 = sphi 0, %s201
      %s203 = sphi 0, %s201
      %s204 = sphi 0, %s203
      %s218 = sphi 0, %s204
      %s224 = sphi 0, %s226
      %s227 = sphi 0, %s224
      %s228 = sphi 0, %s227
      %s244 = sphi 0, %s228
    $region4: #{pada_discriminator_forward.1} parent=1 // loop_header_branch
      %23 = sbr.rel (%p21) target = $region8
    $region5: #{pada_discriminator_forward.1} parent=1 // loop_body
      %s25 = ssub.s32 %s20, 1
      %s26 = ssub.s32 %s20, 2
      %s27 = sadd.s32 %s20, 1
      %s28 = ssub.s32 %s20, %s27
      %p29 = scmp.eq.s32.totalorder %s28, 0
      %s31 = sadd.s32 %s30, 1
      %s32 = scalar_select %p29, %s30, %s31
      %p35 = pneg %p29
      %p36 = scmp.eq.s32.totalorder %s20, 1
      %p37 = por %p35, %p36
      %p38 = scmp.ne.s32.totalorder %s30, %s33
      %p39 = scmp.eq.s32.totalorder %s20, 0
      %p40 = por %p38, %p39
      %p41 = scmp.ne.s32.totalorder %s30, %s33
      %p42 = scmp.eq.s32.totalorder %s25, 1
      %p43 = por %p41, %p42
      %p44 = scmp.ne.s32.totalorder %s33, %s34
      %p45 = scmp.eq.s32.totalorder %s25, 0
      %p46 = por %p44, %p45
      %p47 = scmp.ne.s32.totalorder %s33, %s34
      %p48 = scmp.eq.s32.totalorder %s26, 1
      %p49 = por %p47, %p48
      %p51 = scmp.ne.s32.totalorder %s34, %s50
      %p52 = scmp.eq.s32.totalorder %s26, 0
      %p53 = por %p51, %p52
      %s55 = sadd.s32 %s54, 1
      %p58 = scmp.eq.s32.totalorder %s20, 1
      %p59 = scmp.ne.s32.totalorder %s54, %s56
      %p60 = scmp.eq.s32.totalorder %s20, 0
      %p61 = por %p59, %p60
      %p62 = scmp.ne.s32.totalorder %s54, %s56
      %p63 = scmp.eq.s32.totalorder %s25, 1
      %p64 = por %p62, %p63
      %p65 = scmp.ne.s32.totalorder %s56, %s57
      %p66 = scmp.eq.s32.totalorder %s25, 0
      %p67 = por %p65, %p66
      %p68 = scmp.ne.s32.totalorder %s56, %s57
      %p69 = scmp.eq.s32.totalorder %s26, 1
      %p70 = por %p68, %p69
      %p72 = scmp.ne.s32.totalorder %s57, %s71
      %p73 = scmp.eq.s32.totalorder %s26, 0
      %p74 = por %p72, %p73
      %s76 = sadd.s32 %s75, 1
      %p79 = scmp.eq.s32.totalorder %s20, 1
      %p80 = scmp.ne.s32.totalorder %s75, %s77
      %p81 = scmp.eq.s32.totalorder %s20, 0
      %p82 = por %p80, %p81
      %p83 = scmp.ne.s32.totalorder %s75, %s77
      %p84 = scmp.eq.s32.totalorder %s25, 1
      %p85 = por %p83, %p84
      %p86 = scmp.ne.s32.totalorder %s77, %s78
      %p87 = scmp.eq.s32.totalorder %s25, 0
      %p88 = por %p86, %p87
      %p89 = scmp.ne.s32.totalorder %s77, %s78
      %p90 = scmp.eq.s32.totalorder %s26, 1
      %p91 = por %p89, %p90
      %p93 = scmp.ne.s32.totalorder %s78, %s92
      %p94 = scmp.eq.s32.totalorder %s26, 0
      %p95 = por %p93, %p94
      %s97 = sadd.s32 %s96, 1
      %p100 = scmp.eq.s32.totalorder %s20, 1
      %p101 = scmp.ne.s32.totalorder %s96, %s98
      %p102 = scmp.eq.s32.totalorder %s20, 0
      %p103 = por %p101, %p102
      %p104 = scmp.ne.s32.totalorder %s96, %s98
      %p105 = scmp.eq.s32.totalorder %s25, 1
      %p106 = por %p104, %p105
      %p107 = scmp.ne.s32.totalorder %s98, %s99
      %p108 = scmp.eq.s32.totalorder %s25, 0
      %p109 = por %p107, %p108
      %p110 = scmp.ne.s32.totalorder %s98, %s99
      %p111 = scmp.eq.s32.totalorder %s26, 1
      %p112 = por %p110, %p111
      %p114 = scmp.ne.s32.totalorder %s99, %s113
      %p115 = scmp.eq.s32.totalorder %s26, 0
      %p116 = por %p114, %p115
      %s118 = sadd.s32 %s117, 1
      %p121 = scmp.eq.s32.totalorder %s20, 1
      %p122 = scmp.ne.s32.totalorder %s117, %s119
      %p123 = scmp.eq.s32.totalorder %s20, 0
      %p124 = por %p122, %p123
      %p125 = scmp.ne.s32.totalorder %s117, %s119
      %p126 = scmp.eq.s32.totalorder %s25, 1
      %p127 = por %p125, %p126
      %p128 = scmp.ne.s32.totalorder %s119, %s120
      %p129 = scmp.eq.s32.totalorder %s25, 0
      %p130 = por %p128, %p129
      %p131 = scmp.ne.s32.totalorder %s119, %s120
      %p132 = scmp.eq.s32.totalorder %s26, 1
      %p133 = por %p131, %p132
      %p135 = scmp.ne.s32.totalorder %s120, %s134
      %p136 = scmp.eq.s32.totalorder %s26, 0
      %p137 = por %p135, %p136
      %s139 = sadd.s32 %s138, 1
      %p142 = scmp.eq.s32.totalorder %s20, 1
      %p143 = scmp.ne.s32.totalorder %s138, %s140
      %p144 = scmp.eq.s32.totalorder %s20, 0
      %p145 = por %p143, %p144
      %p146 = scmp.ne.s32.totalorder %s138, %s140
      %p147 = scmp.eq.s32.totalorder %s25, 1
      %p148 = por %p146, %p147
      %p149 = scmp.ne.s32.totalorder %s140, %s141
      %p150 = scmp.eq.s32.totalorder %s25, 0
      %p151 = por %p149, %p150
      %p152 = scmp.ne.s32.totalorder %s140, %s141
      %p153 = scmp.eq.s32.totalorder %s26, 1
      %p154 = por %p152, %p153
      %p156 = scmp.ne.s32.totalorder %s141, %s155
      %p157 = scmp.eq.s32.totalorder %s26, 0
      %p158 = por %p156, %p157
      %s160 = sadd.s32 %s159, 1
      %p163 = scmp.eq.s32.totalorder %s20, 1
      %p164 = scmp.ne.s32.totalorder %s159, %s161
      %p165 = scmp.eq.s32.totalorder %s20, 0
      %p166 = por %p164, %p165
      %p167 = scmp.ne.s32.totalorder %s159, %s161
      %p168 = scmp.eq.s32.totalorder %s25, 1
      %p169 = por %p167, %p168
      %p170 = scmp.ne.s32.totalorder %s161, %s162
      %p171 = scmp.eq.s32.totalorder %s25, 0
      %p172 = por %p170, %p171
      %p173 = scmp.ne.s32.totalorder %s161, %s162
      %p174 = scmp.eq.s32.totalorder %s26, 1
      %p175 = por %p173, %p174
      %p177 = scmp.ne.s32.totalorder %s162, %s176
      %p178 = scmp.eq.s32.totalorder %s26, 0
      %p179 = por %p177, %p178
      %s181 = sadd.s32 %s180, 1
      %p184 = scmp.eq.s32.totalorder %s20, 1
      %p185 = scmp.ne.s32.totalorder %s180, %s182
      %p186 = scmp.eq.s32.totalorder %s20, 0
      %p187 = por %p185, %p186
      %p188 = scmp.ne.s32.totalorder %s180, %s182
      %p189 = scmp.eq.s32.totalorder %s25, 1
      %p190 = por %p188, %p189
      %p191 = scmp.ne.s32.totalorder %s182, %s183
      %p192 = scmp.eq.s32.totalorder %s25, 0
      %p193 = por %p191, %p192
      %p194 = scmp.ne.s32.totalorder %s182, %s183
      %p195 = scmp.eq.s32.totalorder %s26, 1
      %p196 = por %p194, %p195
      %p198 = scmp.ne.s32.totalorder %s183, %s197
      %p199 = scmp.eq.s32.totalorder %s26, 0
      %p200 = por %p198, %p199
      %s202 = sadd.s32 %s201, 1
      %p205 = scmp.eq.s32.totalorder %s20, 1
      %p206 = scmp.ne.s32.totalorder %s201, %s203
      %p207 = scmp.eq.s32.totalorder %s20, 0
      %p208 = por %p206, %p207
      %p209 = scmp.ne.s32.totalorder %s201, %s203
      %p210 = scmp.eq.s32.totalorder %s25, 1
      %p211 = por %p209, %p210
      %p212 = scmp.ne.s32.totalorder %s203, %s204
      %p213 = scmp.eq.s32.totalorder %s25, 0
      %p214 = por %p212, %p213
      %p215 = scmp.ne.s32.totalorder %s203, %s204
      %p216 = scmp.eq.s32.totalorder %s26, 1
      %p217 = por %p215, %p216
      %p219 = scmp.ne.s32.totalorder %s204, %s218
      %p220 = scmp.eq.s32.totalorder %s26, 0
      %p221 = por %p219, %p220
      %s222 = ssub.s32 %s20, %s27
      %p223 = scmp.eq.s32.totalorder %s222, 0
      %s225 = sadd.s32 %s224, 1
      %s226 = scalar_select %p223, %s224, %s225
      %p229 = pneg %p223
      %p230 = scmp.eq.s32.totalorder %s20, 1
      %p231 = por %p229, %p230
      %p232 = scmp.ne.s32.totalorder %s224, %s227
      %p233 = scmp.eq.s32.totalorder %s20, 0
      %p234 = por %p232, %p233
      %p235 = scmp.ne.s32.totalorder %s224, %s227
      %p236 = scmp.eq.s32.totalorder %s25, 1
      %p237 = por %p235, %p236
      %p238 = scmp.ne.s32.totalorder %s227, %s228
      %p239 = scmp.eq.s32.totalorder %s25, 0
      %p240 = por %p238, %p239
      %p241 = scmp.ne.s32.totalorder %s227, %s228
      %p242 = scmp.eq.s32.totalorder %s26, 1
      %p243 = por %p241, %p242
      %p245 = scmp.ne.s32.totalorder %s228, %s244
      %p246 = scmp.eq.s32.totalorder %s26, 0
      %p247 = por %p245, %p246
      %p248 = scmp.le.s32.totalorder 1, %s20
      %p249 = scmp.lt.s32.totalorder %s20, 3
      %p250 = pnand %p248, %p249
      %p251 = pneg %p250
      // Predicated region
      $region9: #{pada_discriminator_forward.1} parent=5 // pred_check
        _
      $region10: #{pada_discriminator_forward.1} parent=5 // pred_check_branch
        %253 = sbr.rel (%p250) target = $region12
      $region11: #{pada_discriminator_forward.1} parent=5 // pred_region
        %s254 = ssub.s32 %s20, 1
        // Predicated region
        $region13: #{pada_discriminator_forward.1} parent=11 // pred_check
          %p255 = pneg %p67
        $region14: #{pada_discriminator_forward.1} parent=11 // pred_check_branch
          %257 = sbr.rel (%p255) target = $region16
        $region15: #{pada_discriminator_forward.1} parent=11 // pred_region
          _
        $region16: #{pada_discriminator_forward.1} parent=11 // pred_fallthru
          _
        // Predicated region
        $region17: #{pada_discriminator_forward.1} parent=11 // pred_check
          %p258 = pneg %p88
        $region18: #{pada_discriminator_forward.1} parent=11 // pred_check_branch
          %260 = sbr.rel (%p258) target = $region20
        $region19: #{pada_discriminator_forward.1} parent=11 // pred_region
          _
        $region20: #{pada_discriminator_forward.1} parent=11 // pred_fallthru
          _
        // Predicated region
        $region21: #{pada_discriminator_forward.1} parent=11 // pred_check
          %p261 = pneg %p109
        $region22: #{pada_discriminator_forward.1} parent=11 // pred_check_branch
          %263 = sbr.rel (%p261) target = $region24
        $region23: #{pada_discriminator_forward.1} parent=11 // pred_region
          _
        $region24: #{pada_discriminator_forward.1} parent=11 // pred_fallthru
          _
        // Predicated region
        $region25: #{pada_discriminator_forward.1} parent=11 // pred_check
          %p264 = pneg %p130
        $region26: #{pada_discriminator_forward.1} parent=11 // pred_check_branch
          %266 = sbr.rel (%p264) target = $region28
        $region27: #{pada_discriminator_forward.1} parent=11 // pred_region
          _
        $region28: #{pada_discriminator_forward.1} parent=11 // pred_fallthru
          _
        // Predicated region
        $region29: #{pada_discriminator_forward.1} parent=11 // pred_check
          %p267 = pneg %p151
        $region30: #{pada_discriminator_forward.1} parent=11 // pred_check_branch
          %269 = sbr.rel (%p267) target = $region32
        $region31: #{pada_discriminator_forward.1} parent=11 // pred_region
          _
        $region32: #{pada_discriminator_forward.1} parent=11 // pred_fallthru
          _
        // Predicated region
        $region33: #{pada_discriminator_forward.1} parent=11 // pred_check
          %p270 = pneg %p172
        $region34: #{pada_discriminator_forward.1} parent=11 // pred_check_branch
          %272 = sbr.rel (%p270) target = $region36
        $region35: #{pada_discriminator_forward.1} parent=11 // pred_region
          _
        $region36: #{pada_discriminator_forward.1} parent=11 // pred_fallthru
          _
        // Predicated region
        $region37: #{pada_discriminator_forward.1} parent=11 // pred_check
          %p273 = pneg %p193
        $region38: #{pada_discriminator_forward.1} parent=11 // pred_check_branch
          %275 = sbr.rel (%p273) target = $region40
        $region39: #{pada_discriminator_forward.1} parent=11 // pred_region
          _
        $region40: #{pada_discriminator_forward.1} parent=11 // pred_fallthru
          _
        // Predicated region
        $region41: #{pada_discriminator_forward.1} parent=11 // pred_check
          %p276 = pneg %p214
        $region42: #{pada_discriminator_forward.1} parent=11 // pred_check_branch
          %278 = sbr.rel (%p276) target = $region44
        $region43: #{pada_discriminator_forward.1} parent=11 // pred_region
          _
        $region44: #{pada_discriminator_forward.1} parent=11 // pred_fallthru
          _
      $region12: #{pada_discriminator_forward.1} parent=5 // pred_fallthru
        _
      %p279 = scmp.lt.s32.totalorder %s20, 2
      // Predicated region
      $region45: #{pada_discriminator_forward.1} parent=5 // pred_check
        %p280 = pneg %p279
      $region46: #{pada_discriminator_forward.1} parent=5 // pred_check_branch
        %282 = sbr.rel (%p280) target = $region48
      $region47: #{pada_discriminator_forward.1} parent=5 // pred_region
        // Predicated region
        $region49: #{pada_discriminator_forward.1} parent=47 // pred_check
          %p283 = pneg %p40
        $region50: #{pada_discriminator_forward.1} parent=47 // pred_check_branch
          %285 = sbr.rel (%p283) target = $region52
        $region51: #{pada_discriminator_forward.1} parent=47 // pred_region
          %s286 = smul.u32 16, %s20
          %p287 = scmp.lt.s32.totalorder %s286, 31
          %s288 = scalar_select %p287, %s286, 31
          %s289 = smul.addr %s288, 4
          %s290 = scalar_lea.vmem %s0, %s289
          %s291 = smul.u32 16, %s20
        $region52: #{pada_discriminator_forward.1} parent=47 // pred_fallthru
          _
      $region48: #{pada_discriminator_forward.1} parent=5 // pred_fallthru
        _
      %p292 = scmp.le.s32.totalorder 1, %s20
      %p293 = scmp.lt.s32.totalorder %s20, 3
      %p294 = pnand %p292, %p293
      %p295 = pneg %p294
      // Predicated region
      $region53: #{pada_discriminator_forward.1} parent=5 // pred_check
        _
      $region54: #{pada_discriminator_forward.1} parent=5 // pred_check_branch
        %297 = sbr.rel (%p294) target = $region56
      $region55: #{pada_discriminator_forward.1} parent=5 // pred_region
        %s298 = ssub.s32 %s20, 1
        %s299 = smul.u32 16, %s25
        %p300 = scmp.lt.s32.totalorder %s299, 31
        %s301 = scalar_select %p300, %s299, 31
        %s302 = smul.addr %s301, 4
        %s303 = scalar_lea.vmem %s0, %s302
        %p304 = pneg %p46
        %p305 = pneg %p43
        %p306 = pneg %p67
        %p307 = pneg %p64
        %p308 = pneg %p88
        %p309 = pneg %p85
        %p310 = pneg %p109
        %p311 = pneg %p106
        %p312 = pneg %p130
        %p313 = pneg %p127
        %p314 = pneg %p151
        %p315 = pneg %p148
        %p316 = pneg %p172
        %p317 = pneg %p169
        %p318 = pneg %p193
        %p319 = pneg %p190
        %p320 = pneg %p214
        %p321 = pneg %p211
        %p322 = pneg %p240
        %p323 = pneg %p237
        %s324 = sand.u32 %s227, 1
        %s325 = scalar_lea.sflag [#allocation4], %s324
        %s326 = sand.u32 %s227, 1
        %s327 = scalar_lea.vmem [#allocation3], %s326
        %s328 = smul.u32 16, %s25
        %p329 = scmp.lt.s32.totalorder %s328, 31
        %s330 = scalar_select %p329, %s328, 31
        %s331 = smul.addr %s330, 4
        %s332 = scalar_lea.vmem %s0, %s331
        %s333 = smul.u32 16, %s25
        %v335 = vld [vmem:[%s332] sm:$0xf]
        %v336 = vld [vmem:[%s332 + $0x4] sm:$0xf]
        %v337 = vld [vmem:[%s332 + $0x8] sm:$0xf]
        %v338 = vld [vmem:[%s332 + $0xc] sm:$0xf]
        %v339 = vld [vmem:[%s332 + $0x10] sm:$0xf]
        %v340 = vld [vmem:[%s332 + $0x14] sm:$0xf]
        %v341 = vld [vmem:[%s332 + $0x18] sm:$0xf]
        %v342 = vld [vmem:[%s332 + $0x1c] sm:$0xf]
        %v343 = vld [vmem:[%s332 + $0x20] sm:$0xf]
        %v344 = vld [vmem:[%s332 + $0x24] sm:$0xf]
        %v345 = vld [vmem:[%s332 + $0x28] sm:$0xf]
        %v346 = vld [vmem:[%s332 + $0x2c] sm:$0xf]
        %v347 = vld [vmem:[%s332 + $0x30] sm:$0xf]
        %v348 = vld [vmem:[%s332 + $0x34] sm:$0xf]
        %v349 = vld [vmem:[%s332 + $0x38] sm:$0xf]
        %v350 = vld [vmem:[%s332 + $0x3c] sm:$0xf]
        %v351 = vld [vmem:[%s1] sm:$0xf]
        %v352 = vld [vmem:[%s1 + $0x4] sm:$0xf]
        %v353 = vld [vmem:[%s1 + $0x8] sm:$0xf]
        %v354 = vld [vmem:[%s1 + $0xc] sm:$0xf]
        %v355 = vld [vmem:[%s1 + $0x10] sm:$0xf]
        %v356 = vld [vmem:[%s1 + $0x14] sm:$0xf]
        %v357 = vld [vmem:[%s1 + $0x18] sm:$0xf]
        %v358 = vld [vmem:[%s1 + $0x1c] sm:$0xf]
        %v359 = vld [vmem:[%s1 + $0x20] sm:$0xf]
        %v360 = vld [vmem:[%s1 + $0x24] sm:$0xf]
        %v361 = vld [vmem:[%s1 + $0x28] sm:$0xf]
        %v362 = vld [vmem:[%s1 + $0x2c] sm:$0xf]
        %v363 = vld [vmem:[%s1 + $0x30] sm:$0xf]
        %v364 = vld [vmem:[%s1 + $0x34] sm:$0xf]
        %v365 = vld [vmem:[%s1 + $0x38] sm:$0xf]
        %v366 = vld [vmem:[%s1 + $0x3c] sm:$0xf]
        %v367 = vld [vmem:[%s2] sm:$0x1]
        %v369 = vlaneseq
        %v370 = vshrl.u32 %v369, 7
        %v371 = vsub.s32 0, %v370
        %v372 = vrot.slane %v367, %v371
        %v390 = vunpack.c.l.b16 %v335
        %v391 = vunpack.c.l.b16 %v336
        %v392 = vunpack.c.l.b16 %v337
        %v393 = vunpack.c.l.b16 %v338
        %v394 = vunpack.c.l.b16 %v339
        %v395 = vunpack.c.l.b16 %v340
        %v396 = vunpack.c.l.b16 %v341
        %v397 = vunpack.c.l.b16 %v342
        %v398 = vunpack.c.l.b16 %v343
        %v399 = vunpack.c.l.b16 %v344
        %v400 = vunpack.c.l.b16 %v345
        %v401 = vunpack.c.l.b16 %v346
        %v402 = vunpack.c.l.b16 %v347
        %v403 = vunpack.c.l.b16 %v348
        %v404 = vunpack.c.l.b16 %v349
        %v405 = vunpack.c.l.b16 %v350
        %v406 = vpack.c.b16 %v391, %v390
        %v407 = vpack.c.b16 %v393, %v392
        %v408 = vpack.c.b16 %v395, %v394
        %v409 = vpack.c.b16 %v397, %v396
        %v410 = vpack.c.b16 %v399, %v398
        %v411 = vpack.c.b16 %v401, %v400
        %v412 = vpack.c.b16 %v403, %v402
        %v413 = vpack.c.b16 %v405, %v404
        %v438 = vunpack.c.l.b16 %v351
        %v439 = vunpack.c.l.b16 %v352
        %v440 = vunpack.c.l.b16 %v353
        %v441 = vunpack.c.l.b16 %v354
        %v442 = vunpack.c.l.b16 %v355
        %v443 = vunpack.c.l.b16 %v356
        %v444 = vunpack.c.l.b16 %v357
        %v445 = vunpack.c.l.b16 %v358
        %v446 = vunpack.c.l.b16 %v359
        %v447 = vunpack.c.l.b16 %v360
        %v448 = vunpack.c.l.b16 %v361
        %v449 = vunpack.c.l.b16 %v362
        %v450 = vunpack.c.l.b16 %v363
        %v451 = vunpack.c.l.b16 %v364
        %v452 = vunpack.c.l.b16 %v365
        %v453 = vunpack.c.l.b16 %v366
        %v454 = vpack.c.b16 %v439, %v438
        %v455 = vpack.c.b16 %v441, %v440
        %v456 = vpack.c.b16 %v443, %v442
        %v457 = vpack.c.b16 %v445, %v444
        %v458 = vpack.c.b16 %v447, %v446
        %v459 = vpack.c.b16 %v449, %v448
        %v460 = vpack.c.b16 %v451, %v450
        %v461 = vpack.c.b16 %v453, %v452
        %470 = vmatprep.subr.bf16.mxu0 0
        %471 = vmatpush1.bf16.msra.mxu0 %v454
        %472 = vmatprep.subr.bf16.mxu0 0
        %473 = vmatpush1.bf16.msra.mxu0 %v455
        %474 = vmatprep.subr.bf16.mxu0 0
        %475 = vmatpush1.bf16.msra.mxu0 %v456
        %476 = vmatprep.subr.bf16.mxu0 0
        %477 = vmatpush1.bf16.msra.mxu0 %v457
        %478 = vmatprep.subr.bf16.mxu0 0
        %479 = vmatpush1.bf16.msra.mxu0 %v458
        %480 = vmatprep.subr.bf16.mxu0 0
        %481 = vmatpush1.bf16.msra.mxu0 %v459
        %482 = vmatprep.subr.bf16.mxu0 0
        %483 = vmatpush1.bf16.msra.mxu0 %v460
        %484 = vmatprep.subr.bf16.mxu0 0
        %485 = vmatpush1.bf16.msra.mxu0 %v461
        %486 = vmatprep.subr.bf16.mxu0 0
        %487 = vmatpush1.bf16.msra.mxu0 0
        %488 = vmatprep.subr.bf16.mxu0 0
        %489 = vmatpush1.bf16.msra.mxu0 0
        %490 = vmatprep.subr.bf16.mxu0 0
        %491 = vmatpush1.bf16.msra.mxu0 0
        %492 = vmatprep.subr.bf16.mxu0 0
        %493 = vmatpush1.bf16.msra.mxu0 0
        %494 = vmatprep.subr.bf16.mxu0 0
        %495 = vmatpush1.bf16.msra.mxu0 0
        %496 = vmatprep.subr.bf16.mxu0 0
        %497 = vmatpush1.bf16.msra.mxu0 0
        %498 = vmatprep.subr.bf16.mxu0 0
        %499 = vmatpush1.bf16.msra.mxu0 0
        %500 = vmatprep.subr.bf16.mxu0 0
        %501 = vmatpush1.bf16.msra.mxu0 0
        %502 = vmatprep.mubr.bf16.mxu0 0
        %503 = vmatmul.mubr.bf16.gmra.mrb[0].mxu0 %v406
        %v504 = vpop.f32.mrb[0].mxu0
        %v505 = vadd.f32 %v372, %v504
        %v506 = vpop.f32.mrb[0].mxu0
        %v507 = vpop.f32.mrb[0].mxu0
        %v508 = vadd.f32 %v372, %v507
        %v509 = vpop.f32.mrb[0].mxu0
        %510 = vmatprep.mubr.bf16.mxu0 0
        %511 = vmatmul.mubr.bf16.gmra.mrb[0].mxu0 %v407
        %v512 = vpop.f32.mrb[0].mxu0
        %v513 = vadd.f32 %v372, %v512
        %v514 = vpop.f32.mrb[0].mxu0
        %v515 = vpop.f32.mrb[0].mxu0
        %v516 = vadd.f32 %v372, %v515
        %v517 = vpop.f32.mrb[0].mxu0
        %518 = vmatprep.mubr.bf16.mxu0 0
        %519 = vmatmul.mubr.bf16.gmra.mrb[0].mxu0 %v408
        %v520 = vpop.f32.mrb[0].mxu0
        %v521 = vadd.f32 %v372, %v520
        %v522 = vpop.f32.mrb[0].mxu0
        %v523 = vpop.f32.mrb[0].mxu0
        %v524 = vadd.f32 %v372, %v523
        %v525 = vpop.f32.mrb[0].mxu0
        %526 = vmatprep.mubr.bf16.mxu0 0
        %527 = vmatmul.mubr.bf16.gmra.mrb[0].mxu0 %v409
        %v528 = vpop.f32.mrb[0].mxu0
        %v529 = vadd.f32 %v372, %v528
        %v530 = vpop.f32.mrb[0].mxu0
        %v531 = vpop.f32.mrb[0].mxu0
        %v532 = vadd.f32 %v372, %v531
        %v533 = vpop.f32.mrb[0].mxu0
        %534 = vmatprep.mubr.bf16.mxu0 0
        %535 = vmatmul.mubr.bf16.gmra.mrb[0].mxu0 %v410
        %v536 = vpop.f32.mrb[0].mxu0
        %v537 = vadd.f32 %v372, %v536
        %v538 = vpop.f32.mrb[0].mxu0
        %v539 = vpop.f32.mrb[0].mxu0
        %v540 = vadd.f32 %v372, %v539
        %v541 = vpop.f32.mrb[0].mxu0
        %542 = vmatprep.mubr.bf16.mxu0 0
        %543 = vmatmul.mubr.bf16.gmra.mrb[0].mxu0 %v411
        %v544 = vpop.f32.mrb[0].mxu0
        %v545 = vadd.f32 %v372, %v544
        %v546 = vpop.f32.mrb[0].mxu0
        %v547 = vpop.f32.mrb[0].mxu0
        %v548 = vadd.f32 %v372, %v547
        %v549 = vpop.f32.mrb[0].mxu0
        %550 = vmatprep.mubr.bf16.mxu0 0
        %551 = vmatmul.mubr.bf16.gmra.mrb[0].mxu0 %v412
        %v552 = vpop.f32.mrb[0].mxu0
        %v553 = vadd.f32 %v372, %v552
        %v554 = vpop.f32.mrb[0].mxu0
        %v555 = vpop.f32.mrb[0].mxu0
        %v556 = vadd.f32 %v372, %v555
        %v557 = vpop.f32.mrb[0].mxu0
        %558 = vmatprep.mubr.bf16.mxu0 0
        %559 = vmatmul.mubr.bf16.gmra.mrb[0].mxu0 %v413
        %v560 = vpop.f32.mrb[0].mxu0
        %v561 = vadd.f32 %v372, %v560
        %v562 = vpop.f32.mrb[0].mxu0
        %v563 = vpop.f32.mrb[0].mxu0
        %v564 = vadd.f32 %v372, %v563
        %v565 = vpop.f32.mrb[0].mxu0
        %566 = vdwg.mxu0
        %v567 = vand.u32 2147483647, %v505
        %v568 = vand.u32 2147483647, %v508
        %v569 = vand.u32 2147483647, %v513
        %v570 = vand.u32 2147483647, %v516
        %v571 = vand.u32 2147483647, %v521
        %v572 = vand.u32 2147483647, %v524
        %v573 = vand.u32 2147483647, %v529
        %v574 = vand.u32 2147483647, %v532
        %v575 = vand.u32 2147483647, %v537
        %v576 = vand.u32 2147483647, %v540
        %v577 = vand.u32 2147483647, %v545
        %v578 = vand.u32 2147483647, %v548
        %v579 = vand.u32 2147483647, %v553
        %v580 = vand.u32 2147483647, %v556
        %v581 = vand.u32 2147483647, %v561
        %v582 = vand.u32 2147483647, %v564
        %v583 = vsub.f32 0.0, %v567
        %v584 = vsub.f32 0.0, %v568
        %v585 = vsub.f32 0.0, %v569
        %v586 = vsub.f32 0.0, %v570
        %v587 = vsub.f32 0.0, %v571
        %v588 = vsub.f32 0.0, %v572
        %v589 = vsub.f32 0.0, %v573
        %v590 = vsub.f32 0.0, %v574
        %v591 = vsub.f32 0.0, %v575
        %v592 = vsub.f32 0.0, %v576
        %v593 = vsub.f32 0.0, %v577
        %v594 = vsub.f32 0.0, %v578
        %v595 = vsub.f32 0.0, %v579
        %v596 = vsub.f32 0.0, %v580
        %v597 = vsub.f32 0.0, %v581
        %v598 = vsub.f32 0.0, %v582
        %v599 = vmul.f32 %v583, 1.442695
        %v600 = vpow.pop %v599
        %v601 = vmul.f32 %v584, 1.442695
        %v602 = vpow.pop %v601
        %v603 = vmul.f32 %v585, 1.442695
        %v604 = vpow.pop %v603
        %v605 = vmul.f32 %v586, 1.442695
        %v606 = vpow.pop %v605
        %v607 = vmul.f32 %v587, 1.442695
        %v608 = vpow.pop %v607
        %v609 = vmul.f32 %v588, 1.442695
        %v610 = vpow.pop %v609
        %v611 = vmul.f32 %v589, 1.442695
        %v612 = vpow.pop %v611
        %v613 = vmul.f32 %v590, 1.442695
        %v614 = vpow.pop %v613
        %v615 = vmul.f32 %v591, 1.442695
        %v616 = vpow.pop %v615
        %v617 = vmul.f32 %v592, 1.442695
        %v618 = vpow.pop %v617
        %v619 = vmul.f32 %v593, 1.442695
        %v620 = vpow.pop %v619
        %v621 = vmul.f32 %v594, 1.442695
        %v622 = vpow.pop %v621
        %v623 = vmul.f32 %v595, 1.442695
        %v624 = vpow.pop %v623
        %v625 = vmul.f32 %v596, 1.442695
        %v626 = vpow.pop %v625
        %v627 = vmul.f32 %v597, 1.442695
        %v628 = vpow.pop %v627
        %v629 = vmul.f32 %v598, 1.442695
        %v630 = vpow.pop %v629
        %v631 = vadd.f32 %v600, 1.0
        %v632 = vadd.f32 %v602, 1.0
        %v633 = vadd.f32 %v604, 1.0
        %v634 = vadd.f32 %v606, 1.0
        %v635 = vadd.f32 %v608, 1.0
        %v636 = vadd.f32 %v610, 1.0
        %v637 = vadd.f32 %v612, 1.0
        %v638 = vadd.f32 %v614, 1.0
        %v639 = vadd.f32 %v616, 1.0
        %v640 = vadd.f32 %v618, 1.0
        %v641 = vadd.f32 %v620, 1.0
        %v642 = vadd.f32 %v622, 1.0
        %v643 = vadd.f32 %v624, 1.0
        %v644 = vadd.f32 %v626, 1.0
        %v645 = vadd.f32 %v628, 1.0
        %v646 = vadd.f32 %v630, 1.0
        %v647 = vrcp.pop %v631
        %v648 = vrcp.pop %v632
        %v649 = vrcp.pop %v633
        %v650 = vrcp.pop %v634
        %v651 = vrcp.pop %v635
        %v652 = vrcp.pop %v636
        %v653 = vrcp.pop %v637
        %v654 = vrcp.pop %v638
        %v655 = vrcp.pop %v639
        %v656 = vrcp.pop %v640
        %v657 = vrcp.pop %v641
        %v658 = vrcp.pop %v642
        %v659 = vrcp.pop %v643
        %v660 = vrcp.pop %v644
        %v661 = vrcp.pop %v645
        %v662 = vrcp.pop %v646
        %vm663 = vcmp.ge.f32.partialorder %v505, 0.0
        %vm664 = vcmp.ge.f32.partialorder %v508, 0.0
        %vm665 = vcmp.ge.f32.partialorder %v513, 0.0
        %vm666 = vcmp.ge.f32.partialorder %v516, 0.0
        %vm667 = vcmp.ge.f32.partialorder %v521, 0.0
        %vm668 = vcmp.ge.f32.partialorder %v524, 0.0
        %vm669 = vcmp.ge.f32.partialorder %v529, 0.0
        %vm670 = vcmp.ge.f32.partialorder %v532, 0.0
        %vm671 = vcmp.ge.f32.partialorder %v537, 0.0
        %vm672 = vcmp.ge.f32.partialorder %v540, 0.0
        %vm673 = vcmp.ge.f32.partialorder %v545, 0.0
        %vm674 = vcmp.ge.f32.partialorder %v548, 0.0
        %vm675 = vcmp.ge.f32.partialorder %v553, 0.0
        %vm676 = vcmp.ge.f32.partialorder %v556, 0.0
        %vm677 = vcmp.ge.f32.partialorder %v561, 0.0
        %vm678 = vcmp.ge.f32.partialorder %v564, 0.0
        %v679 = vmul.f32 %v600, %v647
        %v680 = vmul.f32 %v602, %v648
        %v681 = vmul.f32 %v604, %v649
        %v682 = vmul.f32 %v606, %v650
        %v683 = vmul.f32 %v608, %v651
        %v684 = vmul.f32 %v610, %v652
        %v685 = vmul.f32 %v612, %v653
        %v686 = vmul.f32 %v614, %v654
        %v687 = vmul.f32 %v616, %v655
        %v688 = vmul.f32 %v618, %v656
        %v689 = vmul.f32 %v620, %v657
        %v690 = vmul.f32 %v622, %v658
        %v691 = vmul.f32 %v624, %v659
        %v692 = vmul.f32 %v626, %v660
        %v693 = vmul.f32 %v628, %v661
        %v694 = vmul.f32 %v630, %v662
        %v695 = vsel %vm663, %v647, %v679
        %v696 = vsel %vm664, %v648, %v680
        %v697 = vsel %vm665, %v649, %v681
        %v698 = vsel %vm666, %v650, %v682
        %v699 = vsel %vm667, %v651, %v683
        %v700 = vsel %vm668, %v652, %v684
        %v701 = vsel %vm669, %v653, %v685
        %v702 = vsel %vm670, %v654, %v686
        %v703 = vsel %vm671, %v655, %v687
        %v704 = vsel %vm672, %v656, %v688
        %v705 = vsel %vm673, %v657, %v689
        %v706 = vsel %vm674, %v658, %v690
        %v707 = vsel %vm675, %v659, %v691
        %v708 = vsel %vm676, %v660, %v692
        %v709 = vsel %vm677, %v661, %v693
        %v710 = vsel %vm678, %v662, %v694
        %v711 = vpack.c.bf16 %v696, %v695
        %v712 = vpack.c.bf16 %v698, %v697
        %v713 = vpack.c.bf16 %v700, %v699
        %v714 = vpack.c.bf16 %v702, %v701
        %v715 = vpack.c.bf16 %v704, %v703
        %v716 = vpack.c.bf16 %v706, %v705
        %v717 = vpack.c.bf16 %v708, %v707
        %v718 = vpack.c.bf16 %v710, %v709
        %v719 = vld [vmem:[%s3] sm:$0xf]
        %v720 = vld [vmem:[%s3 + $0x4] sm:$0xf]
        %v721 = vld [vmem:[%s3 + $0x8] sm:$0xf]
        %v722 = vld [vmem:[%s3 + $0xc] sm:$0xf]
        %v723 = vld [vmem:[%s4] sm:$0x1]
        %v725 = vlaneseq
        %v726 = vshrl.u32 %v725, 7
        %v727 = vsub.s32 0, %v726
        %v728 = vrot.slane %v723, %v727
        %v734 = vunpack.c.l.b16 %v719
        %v735 = vunpack.c.l.b16 %v720
        %v736 = vunpack.c.l.b16 %v721
        %v737 = vunpack.c.l.b16 %v722
        %v738 = vpack.c.b16 %v735, %v734
        %v739 = vpack.c.b16 %v737, %v736
        %vm742 = vcmask 261120
        %v744 = vsel %vm742, %v711, 0
        %v747 = vsel %vm742, %v712, 0
        %v750 = vsel %vm742, %v713, 0
        %v753 = vsel %vm742, %v714, 0
        %v756 = vsel %vm742, %v715, 0
        %v759 = vsel %vm742, %v716, 0
        %v762 = vsel %vm742, %v717, 0
        %v765 = vsel %vm742, %v718, 0
        %767 = vmatprep.subr.bf16.mxu0 0
        %768 = vmatpush1.bf16.msra.mxu0 %v738
        %769 = vmatprep.subr.bf16.mxu0 0
        %770 = vmatpush1.bf16.msra.mxu0 %v739
        %771 = vmatprep.subr.bf16.mxu0 0
        %772 = vmatpush1.bf16.msra.mxu0 0
        %773 = vmatprep.subr.bf16.mxu0 0
        %774 = vmatpush1.bf16.msra.mxu0 0
        %775 = vmatprep.subr.bf16.mxu0 0
        %776 = vmatpush1.bf16.msra.mxu0 0
        %777 = vmatprep.subr.bf16.mxu0 0
        %778 = vmatpush1.bf16.msra.mxu0 0
        %779 = vmatprep.subr.bf16.mxu0 0
        %780 = vmatpush1.bf16.msra.mxu0 0
        %781 = vmatprep.subr.bf16.mxu0 0
        %782 = vmatpush1.bf16.msra.mxu0 0
        %783 = vmatprep.subr.bf16.mxu0 0
        %784 = vmatpush1.bf16.msra.mxu0 0
        %785 = vmatprep.subr.bf16.mxu0 0
        %786 = vmatpush1.bf16.msra.mxu0 0
        %787 = vmatprep.subr.bf16.mxu0 0
        %788 = vmatpush1.bf16.msra.mxu0 0
        %789 = vmatprep.subr.bf16.mxu0 0
        %790 = vmatpush1.bf16.msra.mxu0 0
        %791 = vmatprep.subr.bf16.mxu0 0
        %792 = vmatpush1.bf16.msra.mxu0 0
        %793 = vmatprep.subr.bf16.mxu0 0
        %794 = vmatpush1.bf16.msra.mxu0 0
        %795 = vmatprep.subr.bf16.mxu0 0
        %796 = vmatpush1.bf16.msra.mxu0 0
        %797 = vmatprep.subr.bf16.mxu0 0
        %798 = vmatpush1.bf16.msra.mxu0 0
        %799 = vmatprep.mubr.bf16.mxu0 0
        %800 = vmatmul.mubr.bf16.gmra.mrb[0].mxu0 %v744
        %v801 = vpop.f32.mrb[0].mxu0
        %v802 = vadd.f32 %v728, %v801
        %v803 = vpop.f32.mrb[0].mxu0
        %v804 = vpop.f32.mrb[0].mxu0
        %v805 = vadd.f32 %v728, %v804
        %v806 = vpop.f32.mrb[0].mxu0
        %807 = vmatprep.mubr.bf16.mxu0 0
        %808 = vmatmul.mubr.bf16.gmra.mrb[0].mxu0 %v747
        %v809 = vpop.f32.mrb[0].mxu0
        %v810 = vadd.f32 %v728, %v809
        %v811 = vpop.f32.mrb[0].mxu0
        %v812 = vpop.f32.mrb[0].mxu0
        %v813 = vadd.f32 %v728, %v812
        %v814 = vpop.f32.mrb[0].mxu0
        %815 = vmatprep.mubr.bf16.mxu0 0
        %816 = vmatmul.mubr.bf16.gmra.mrb[0].mxu0 %v750
        %v817 = vpop.f32.mrb[0].mxu0
        %v818 = vadd.f32 %v728, %v817
        %v819 = vpop.f32.mrb[0].mxu0
        %v820 = vpop.f32.mrb[0].mxu0
        %v821 = vadd.f32 %v728, %v820
        %v822 = vpop.f32.mrb[0].mxu0
        %823 = vmatprep.mubr.bf16.mxu0 0
        %824 = vmatmul.mubr.bf16.gmra.mrb[0].mxu0 %v753
        %v825 = vpop.f32.mrb[0].mxu0
        %v826 = vadd.f32 %v728, %v825
        %v827 = vpop.f32.mrb[0].mxu0
        %v828 = vpop.f32.mrb[0].mxu0
        %v829 = vadd.f32 %v728, %v828
        %v830 = vpop.f32.mrb[0].mxu0
        %831 = vmatprep.mubr.bf16.mxu0 0
        %832 = vmatmul.mubr.bf16.gmra.mrb[0].mxu0 %v756
        %v833 = vpop.f32.mrb[0].mxu0
        %v834 = vadd.f32 %v728, %v833
        %v835 = vpop.f32.mrb[0].mxu0
        %v836 = vpop.f32.mrb[0].mxu0
        %v837 = vadd.f32 %v728, %v836
        %v838 = vpop.f32.mrb[0].mxu0
        %839 = vmatprep.mubr.bf16.mxu0 0
        %840 = vmatmul.mubr.bf16.gmra.mrb[0].mxu0 %v759
        %v841 = vpop.f32.mrb[0].mxu0
        %v842 = vadd.f32 %v728, %v841
        %v843 = vpop.f32.mrb[0].mxu0
        %v844 = vpop.f32.mrb[0].mxu0
        %v845 = vadd.f32 %v728, %v844
        %v846 = vpop.f32.mrb[0].mxu0
        %847 = vmatprep.mubr.bf16.mxu0 0
        %848 = vmatmul.mubr.bf16.gmra.mrb[0].mxu0 %v762
        %v849 = vpop.f32.mrb[0].mxu0
        %v850 = vadd.f32 %v728, %v849
        %v851 = vpop.f32.mrb[0].mxu0
        %v852 = vpop.f32.mrb[0].mxu0
        %v853 = vadd.f32 %v728, %v852
        %v854 = vpop.f32.mrb[0].mxu0
        %855 = vmatprep.mubr.bf16.mxu0 0
        %856 = vmatmul.mubr.bf16.gmra.mrb[0].mxu0 %v765
        %v857 = vpop.f32.mrb[0].mxu0
        %v858 = vadd.f32 %v728, %v857
        %v859 = vpop.f32.mrb[0].mxu0
        %v860 = vpop.f32.mrb[0].mxu0
        %v861 = vadd.f32 %v728, %v860
        %v862 = vpop.f32.mrb[0].mxu0
        %863 = vdwg.mxu0
        %v864 = vand.u32 2147483647, %v802
        %v865 = vand.u32 2147483647, %v805
        %v866 = vand.u32 2147483647, %v810
        %v867 = vand.u32 2147483647, %v813
        %v868 = vand.u32 2147483647, %v818
        %v869 = vand.u32 2147483647, %v821
        %v870 = vand.u32 2147483647, %v826
        %v871 = vand.u32 2147483647, %v829
        %v872 = vand.u32 2147483647, %v834
        %v873 = vand.u32 2147483647, %v837
        %v874 = vand.u32 2147483647, %v842
        %v875 = vand.u32 2147483647, %v845
        %v876 = vand.u32 2147483647, %v850
        %v877 = vand.u32 2147483647, %v853
        %v878 = vand.u32 2147483647, %v858
        %v879 = vand.u32 2147483647, %v861
        %v880 = vsub.f32 0.0, %v864
        %v881 = vsub.f32 0.0, %v865
        %v882 = vsub.f32 0.0, %v866
        %v883 = vsub.f32 0.0, %v867
        %v884 = vsub.f32 0.0, %v868
        %v885 = vsub.f32 0.0, %v869
        %v886 = vsub.f32 0.0, %v870
        %v887 = vsub.f32 0.0, %v871
        %v888 = vsub.f32 0.0, %v872
        %v889 = vsub.f32 0.0, %v873
        %v890 = vsub.f32 0.0, %v874
        %v891 = vsub.f32 0.0, %v875
        %v892 = vsub.f32 0.0, %v876
        %v893 = vsub.f32 0.0, %v877
        %v894 = vsub.f32 0.0, %v878
        %v895 = vsub.f32 0.0, %v879
        %v896 = vmul.f32 %v880, 1.442695
        %v897 = vpow.pop %v896
        %v898 = vmul.f32 %v881, 1.442695
        %v899 = vpow.pop %v898
        %v900 = vmul.f32 %v882, 1.442695
        %v901 = vpow.pop %v900
        %v902 = vmul.f32 %v883, 1.442695
        %v903 = vpow.pop %v902
        %v904 = vmul.f32 %v884, 1.442695
        %v905 = vpow.pop %v904
        %v906 = vmul.f32 %v885, 1.442695
        %v907 = vpow.pop %v906
        %v908 = vmul.f32 %v886, 1.442695
        %v909 = vpow.pop %v908
        %v910 = vmul.f32 %v887, 1.442695
        %v911 = vpow.pop %v910
        %v912 = vmul.f32 %v888, 1.442695
        %v913 = vpow.pop %v912
        %v914 = vmul.f32 %v889, 1.442695
        %v915 = vpow.pop %v914
        %v916 = vmul.f32 %v890, 1.442695
        %v917 = vpow.pop %v916
        %v918 = vmul.f32 %v891, 1.442695
        %v919 = vpow.pop %v918
        %v920 = vmul.f32 %v892, 1.442695
        %v921 = vpow.pop %v920
        %v922 = vmul.f32 %v893, 1.442695
        %v923 = vpow.pop %v922
        %v924 = vmul.f32 %v894, 1.442695
        %v925 = vpow.pop %v924
        %v926 = vmul.f32 %v895, 1.442695
        %v927 = vpow.pop %v926
        %v928 = vadd.f32 %v897, 1.0
        %v929 = vadd.f32 %v899, 1.0
        %v930 = vadd.f32 %v901, 1.0
        %v931 = vadd.f32 %v903, 1.0
        %v932 = vadd.f32 %v905, 1.0
        %v933 = vadd.f32 %v907, 1.0
        %v934 = vadd.f32 %v909, 1.0
        %v935 = vadd.f32 %v911, 1.0
        %v936 = vadd.f32 %v913, 1.0
        %v937 = vadd.f32 %v915, 1.0
        %v938 = vadd.f32 %v917, 1.0
        %v939 = vadd.f32 %v919, 1.0
        %v940 = vadd.f32 %v921, 1.0
        %v941 = vadd.f32 %v923, 1.0
        %v942 = vadd.f32 %v925, 1.0
        %v943 = vadd.f32 %v927, 1.0
        %v944 = vrcp.pop %v928
        %v945 = vrcp.pop %v929
        %v946 = vrcp.pop %v930
        %v947 = vrcp.pop %v931
        %v948 = vrcp.pop %v932
        %v949 = vrcp.pop %v933
        %v950 = vrcp.pop %v934
        %v951 = vrcp.pop %v935
        %v952 = vrcp.pop %v936
        %v953 = vrcp.pop %v937
        %v954 = vrcp.pop %v938
        %v955 = vrcp.pop %v939
        %v956 = vrcp.pop %v940
        %v957 = vrcp.pop %v941
        %v958 = vrcp.pop %v942
        %v959 = vrcp.pop %v943
        %vm960 = vcmp.ge.f32.partialorder %v802, 0.0
        %vm961 = vcmp.ge.f32.partialorder %v805, 0.0
        %vm962 = vcmp.ge.f32.partialorder %v810, 0.0
        %vm963 = vcmp.ge.f32.partialorder %v813, 0.0
        %vm964 = vcmp.ge.f32.partialorder %v818, 0.0
        %vm965 = vcmp.ge.f32.partialorder %v821, 0.0
        %vm966 = vcmp.ge.f32.partialorder %v826, 0.0
        %vm967 = vcmp.ge.f32.partialorder %v829, 0.0
        %vm968 = vcmp.ge.f32.partialorder %v834, 0.0
        %vm969 = vcmp.ge.f32.partialorder %v837, 0.0
        %vm970 = vcmp.ge.f32.partialorder %v842, 0.0
        %vm971 = vcmp.ge.f32.partialorder %v845, 0.0
        %vm972 = vcmp.ge.f32.partialorder %v850, 0.0
        %vm973 = vcmp.ge.f32.partialorder %v853, 0.0
        %vm974 = vcmp.ge.f32.partialorder %v858, 0.0
        %vm975 = vcmp.ge.f32.partialorder %v861, 0.0
        %v976 = vmul.f32 %v897, %v944
        %v977 = vmul.f32 %v899, %v945
        %v978 = vmul.f32 %v901, %v946
        %v979 = vmul.f32 %v903, %v947
        %v980 = vmul.f32 %v905, %v948
        %v981 = vmul.f32 %v907, %v949
        %v982 = vmul.f32 %v909, %v950
        %v983 = vmul.f32 %v911, %v951
        %v984 = vmul.f32 %v913, %v952
        %v985 = vmul.f32 %v915, %v953
        %v986 = vmul.f32 %v917, %v954
        %v987 = vmul.f32 %v919, %v955
        %v988 = vmul.f32 %v921, %v956
        %v989 = vmul.f32 %v923, %v957
        %v990 = vmul.f32 %v925, %v958
        %v991 = vmul.f32 %v927, %v959
        %v992 = vsel %vm960, %v944, %v976
        %v993 = vsel %vm961, %v945, %v977
        %v994 = vsel %vm962, %v946, %v978
        %v995 = vsel %vm963, %v947, %v979
        %v996 = vsel %vm964, %v948, %v980
        %v997 = vsel %vm965, %v949, %v981
        %v998 = vsel %vm966, %v950, %v982
        %v999 = vsel %vm967, %v951, %v983
        %v1000 = vsel %vm968, %v952, %v984
        %v1001 = vsel %vm969, %v953, %v985
        %v1002 = vsel %vm970, %v954, %v986
        %v1003 = vsel %vm971, %v955, %v987
        %v1004 = vsel %vm972, %v956, %v988
        %v1005 = vsel %vm973, %v957, %v989
        %v1006 = vsel %vm974, %v958, %v990
        %v1007 = vsel %vm975, %v959, %v991
        %v1008 = vpack.c.bf16 %v993, %v992
        %v1009 = vpack.c.bf16 %v995, %v994
        %v1010 = vpack.c.bf16 %v997, %v996
        %v1011 = vpack.c.bf16 %v999, %v998
        %v1012 = vpack.c.bf16 %v1001, %v1000
        %v1013 = vpack.c.bf16 %v1003, %v1002
        %v1014 = vpack.c.bf16 %v1005, %v1004
        %v1015 = vpack.c.bf16 %v1007, %v1006
        %v1016 = vld [vmem:[%s5] sm:$0xf]
        %v1017 = vld [vmem:[%s5 + $0x4] sm:$0xf]
        %v1018 = vld [vmem:[%s5 + $0x8] sm:$0xf]
        %v1019 = vld [vmem:[%s5 + $0xc] sm:$0xf]
        %v1020 = vld [vmem:[%s5 + $0x10] sm:$0xf]
        %v1021 = vld [vmem:[%s5 + $0x14] sm:$0xf]
        %v1022 = vld [vmem:[%s5 + $0x18] sm:$0xf]
        %v1023 = vld [vmem:[%s5 + $0x1c] sm:$0xf]
        %v1024 = vld [vmem:[%s5 + $0x20] sm:$0xf]
        %v1025 = vld [vmem:[%s5 + $0x24] sm:$0xf]
        %v1026 = vld [vmem:[%s5 + $0x28] sm:$0xf]
        %v1027 = vld [vmem:[%s5 + $0x2c] sm:$0xf]
        %v1028 = vld [vmem:[%s5 + $0x30] sm:$0xf]
        %v1029 = vld [vmem:[%s5 + $0x34] sm:$0xf]
        %v1030 = vld [vmem:[%s5 + $0x38] sm:$0xf]
        %v1031 = vld [vmem:[%s5 + $0x3c] sm:$0xf]
        %v1032 = vld [vmem:[%s6] sm:$0x1]
        %v1034 = vlaneseq
        %v1035 = vshrl.u32 %v1034, 7
        %v1036 = vsub.s32 0, %v1035
        %v1037 = vrot.slane %v1032, %v1036
        %v1055 = vunpack.c.l.b16 %v1016
        %v1056 = vunpack.c.l.b16 %v1017
        %v1057 = vunpack.c.l.b16 %v1018
        %v1058 = vunpack.c.l.b16 %v1019
        %v1059 = vunpack.c.l.b16 %v1020
        %v1060 = vunpack.c.l.b16 %v1021
        %v1061 = vunpack.c.l.b16 %v1022
        %v1062 = vunpack.c.l.b16 %v1023
        %v1063 = vunpack.c.l.b16 %v1024
        %v1064 = vunpack.c.l.b16 %v1025
        %v1065 = vunpack.c.l.b16 %v1026
        %v1066 = vunpack.c.l.b16 %v1027
        %v1067 = vunpack.c.l.b16 %v1028
        %v1068 = vunpack.c.l.b16 %v1029
        %v1069 = vunpack.c.l.b16 %v1030
        %v1070 = vunpack.c.l.b16 %v1031
        %v1071 = vpack.c.b16 %v1056, %v1055
        %v1072 = vpack.c.b16 %v1058, %v1057
        %v1073 = vpack.c.b16 %v1060, %v1059
        %v1074 = vpack.c.b16 %v1062, %v1061
        %v1075 = vpack.c.b16 %v1064, %v1063
        %v1076 = vpack.c.b16 %v1066, %v1065
        %v1077 = vpack.c.b16 %v1068, %v1067
        %v1078 = vpack.c.b16 %v1070, %v1069
        %1087 = vmatprep.subr.bf16.mxu0 0
        %1088 = vmatpush1.bf16.msra.mxu0 %v1071
        %1089 = vmatprep.subr.bf16.mxu0 0
        %1090 = vmatpush1.bf16.msra.mxu0 %v1072
        %1091 = vmatprep.subr.bf16.mxu0 0
        %1092 = vmatpush1.bf16.msra.mxu0 %v1073
        %1093 = vmatprep.subr.bf16.mxu0 0
        %1094 = vmatpush1.bf16.msra.mxu0 %v1074
        %1095 = vmatprep.subr.bf16.mxu0 0
        %1096 = vmatpush1.bf16.msra.mxu0 %v1075
        %1097 = vmatprep.subr.bf16.mxu0 0
        %1098 = vmatpush1.bf16.msra.mxu0 %v1076
        %1099 = vmatprep.subr.bf16.mxu0 0
        %1100 = vmatpush1.bf16.msra.mxu0 %v1077
        %1101 = vmatprep.subr.bf16.mxu0 0
        %1102 = vmatpush1.bf16.msra.mxu0 %v1078
        %1103 = vmatprep.subr.bf16.mxu0 0
        %1104 = vmatpush1.bf16.msra.mxu0 0
        %1105 = vmatprep.subr.bf16.mxu0 0
        %1106 = vmatpush1.bf16.msra.mxu0 0
        %1107 = vmatprep.subr.bf16.mxu0 0
        %1108 = vmatpush1.bf16.msra.mxu0 0
        %1109 = vmatprep.subr.bf16.mxu0 0
        %1110 = vmatpush1.bf16.msra.mxu0 0
        %1111 = vmatprep.subr.bf16.mxu0 0
        %1112 = vmatpush1.bf16.msra.mxu0 0
        %1113 = vmatprep.subr.bf16.mxu0 0
        %1114 = vmatpush1.bf16.msra.mxu0 0
        %1115 = vmatprep.subr.bf16.mxu0 0
        %1116 = vmatpush1.bf16.msra.mxu0 0
        %1117 = vmatprep.subr.bf16.mxu0 0
        %1118 = vmatpush1.bf16.msra.mxu0 0
        %1119 = vmatprep.mubr.bf16.mxu0 0
        %1120 = vmatmul.mubr.bf16.gmra.mrb[0].mxu0 %v1008
        %v1121 = vpop.f32.mrb[0].mxu0
        %v1122 = vadd.f32 %v1037, %v1121
        %v1123 = vpop.f32.mrb[0].mxu0
        %v1124 = vpop.f32.mrb[0].mxu0
        %v1125 = vadd.f32 %v1037, %v1124
        %v1126 = vpop.f32.mrb[0].mxu0
        %1127 = vmatprep.mubr.bf16.mxu0 0
        %1128 = vmatmul.mubr.bf16.gmra.mrb[0].mxu0 %v1009
        %v1129 = vpop.f32.mrb[0].mxu0
        %v1130 = vadd.f32 %v1037, %v1129
        %v1131 = vpop.f32.mrb[0].mxu0
        %v1132 = vpop.f32.mrb[0].mxu0
        %v1133 = vadd.f32 %v1037, %v1132
        %v1134 = vpop.f32.mrb[0].mxu0
        %1135 = vmatprep.mubr.bf16.mxu0 0
        %1136 = vmatmul.mubr.bf16.gmra.mrb[0].mxu0 %v1010
        %v1137 = vpop.f32.mrb[0].mxu0
        %v1138 = vadd.f32 %v1037, %v1137
        %v1139 = vpop.f32.mrb[0].mxu0
        %v1140 = vpop.f32.mrb[0].mxu0
        %v1141 = vadd.f32 %v1037, %v1140
        %v1142 = vpop.f32.mrb[0].mxu0
        %1143 = vmatprep.mubr.bf16.mxu0 0
        %1144 = vmatmul.mubr.bf16.gmra.mrb[0].mxu0 %v1011
        %v1145 = vpop.f32.mrb[0].mxu0
        %v1146 = vadd.f32 %v1037, %v1145
        %v1147 = vpop.f32.mrb[0].mxu0
        %v1148 = vpop.f32.mrb[0].mxu0
        %v1149 = vadd.f32 %v1037, %v1148
        %v1150 = vpop.f32.mrb[0].mxu0
        %1151 = vmatprep.mubr.bf16.mxu0 0
        %1152 = vmatmul.mubr.bf16.gmra.mrb[0].mxu0 %v1012
        %v1153 = vpop.f32.mrb[0].mxu0
        %v1154 = vadd.f32 %v1037, %v1153
        %v1155 = vpop.f32.mrb[0].mxu0
        %v1156 = vpop.f32.mrb[0].mxu0
        %v1157 = vadd.f32 %v1037, %v1156
        %v1158 = vpop.f32.mrb[0].mxu0
        %1159 = vmatprep.mubr.bf16.mxu0 0
        %1160 = vmatmul.mubr.bf16.gmra.mrb[0].mxu0 %v1013
        %v1161 = vpop.f32.mrb[0].mxu0
        %v1162 = vadd.f32 %v1037, %v1161
        %v1163 = vpop.f32.mrb[0].mxu0
        %v1164 = vpop.f32.mrb[0].mxu0
        %v1165 = vadd.f32 %v1037, %v1164
        %v1166 = vpop.f32.mrb[0].mxu0
        %1167 = vmatprep.mubr.bf16.mxu0 0
        %1168 = vmatmul.mubr.bf16.gmra.mrb[0].mxu0 %v1014
        %v1169 = vpop.f32.mrb[0].mxu0
        %v1170 = vadd.f32 %v1037, %v1169
        %v1171 = vpop.f32.mrb[0].mxu0
        %v1172 = vpop.f32.mrb[0].mxu0
        %v1173 = vadd.f32 %v1037, %v1172
        %v1174 = vpop.f32.mrb[0].mxu0
        %1175 = vmatprep.mubr.bf16.mxu0 0
        %1176 = vmatmul.mubr.bf16.gmra.mrb[0].mxu0 %v1015
        %v1177 = vpop.f32.mrb[0].mxu0
        %v1178 = vadd.f32 %v1037, %v1177
        %v1179 = vpop.f32.mrb[0].mxu0
        %v1180 = vpop.f32.mrb[0].mxu0
        %v1181 = vadd.f32 %v1037, %v1180
        %v1182 = vpop.f32.mrb[0].mxu0
        %1183 = vdwg.mxu0
        %v1184 = vand.u32 2147483647, %v1122
        %v1185 = vand.u32 2147483647, %v1125
        %v1186 = vand.u32 2147483647, %v1130
        %v1187 = vand.u32 2147483647, %v1133
        %v1188 = vand.u32 2147483647, %v1138
        %v1189 = vand.u32 2147483647, %v1141
        %v1190 = vand.u32 2147483647, %v1146
        %v1191 = vand.u32 2147483647, %v1149
        %v1192 = vand.u32 2147483647, %v1154
        %v1193 = vand.u32 2147483647, %v1157
        %v1194 = vand.u32 2147483647, %v1162
        %v1195 = vand.u32 2147483647, %v1165
        %v1196 = vand.u32 2147483647, %v1170
        %v1197 = vand.u32 2147483647, %v1173
        %v1198 = vand.u32 2147483647, %v1178
        %v1199 = vand.u32 2147483647, %v1181
        %v1200 = vsub.f32 0.0, %v1184
        %v1201 = vsub.f32 0.0, %v1185
        %v1202 = vsub.f32 0.0, %v1186
        %v1203 = vsub.f32 0.0, %v1187
        %v1204 = vsub.f32 0.0, %v1188
        %v1205 = vsub.f32 0.0, %v1189
        %v1206 = vsub.f32 0.0, %v1190
        %v1207 = vsub.f32 0.0, %v1191
        %v1208 = vsub.f32 0.0, %v1192
        %v1209 = vsub.f32 0.0, %v1193
        %v1210 = vsub.f32 0.0, %v1194
        %v1211 = vsub.f32 0.0, %v1195
        %v1212 = vsub.f32 0.0, %v1196
        %v1213 = vsub.f32 0.0, %v1197
        %v1214 = vsub.f32 0.0, %v1198
        %v1215 = vsub.f32 0.0, %v1199
        %v1216 = vmul.f32 %v1200, 1.442695
        %v1217 = vpow.pop %v1216
        %v1218 = vmul.f32 %v1201, 1.442695
        %v1219 = vpow.pop %v1218
        %v1220 = vmul.f32 %v1202, 1.442695
        %v1221 = vpow.pop %v1220
        %v1222 = vmul.f32 %v1203, 1.442695
        %v1223 = vpow.pop %v1222
        %v1224 = vmul.f32 %v1204, 1.442695
        %v1225 = vpow.pop %v1224
        %v1226 = vmul.f32 %v1205, 1.442695
        %v1227 = vpow.pop %v1226
        %v1228 = vmul.f32 %v1206, 1.442695
        %v1229 = vpow.pop %v1228
        %v1230 = vmul.f32 %v1207, 1.442695
        %v1231 = vpow.pop %v1230
        %v1232 = vmul.f32 %v1208, 1.442695
        %v1233 = vpow.pop %v1232
        %v1234 = vmul.f32 %v1209, 1.442695
        %v1235 = vpow.pop %v1234
        %v1236 = vmul.f32 %v1210, 1.442695
        %v1237 = vpow.pop %v1236
        %v1238 = vmul.f32 %v1211, 1.442695
        %v1239 = vpow.pop %v1238
        %v1240 = vmul.f32 %v1212, 1.442695
        %v1241 = vpow.pop %v1240
        %v1242 = vmul.f32 %v1213, 1.442695
        %v1243 = vpow.pop %v1242
        %v1244 = vmul.f32 %v1214, 1.442695
        %v1245 = vpow.pop %v1244
        %v1246 = vmul.f32 %v1215, 1.442695
        %v1247 = vpow.pop %v1246
        %v1248 = vadd.f32 %v1217, 1.0
        %v1249 = vadd.f32 %v1219, 1.0
        %v1250 = vadd.f32 %v1221, 1.0
        %v1251 = vadd.f32 %v1223, 1.0
        %v1252 = vadd.f32 %v1225, 1.0
        %v1253 = vadd.f32 %v1227, 1.0
        %v1254 = vadd.f32 %v1229, 1.0
        %v1255 = vadd.f32 %v1231, 1.0
        %v1256 = vadd.f32 %v1233, 1.0
        %v1257 = vadd.f32 %v1235, 1.0
        %v1258 = vadd.f32 %v1237, 1.0
        %v1259 = vadd.f32 %v1239, 1.0
        %v1260 = vadd.f32 %v1241, 1.0
        %v1261 = vadd.f32 %v1243, 1.0
        %v1262 = vadd.f32 %v1245, 1.0
        %v1263 = vadd.f32 %v1247, 1.0
        %v1264 = vrcp.pop %v1248
        %v1265 = vrcp.pop %v1249
        %v1266 = vrcp.pop %v1250
        %v1267 = vrcp.pop %v1251
        %v1268 = vrcp.pop %v1252
        %v1269 = vrcp.pop %v1253
        %v1270 = vrcp.pop %v1254
        %v1271 = vrcp.pop %v1255
        %v1272 = vrcp.pop %v1256
        %v1273 = vrcp.pop %v1257
        %v1274 = vrcp.pop %v1258
        %v1275 = vrcp.pop %v1259
        %v1276 = vrcp.pop %v1260
        %v1277 = vrcp.pop %v1261
        %v1278 = vrcp.pop %v1262
        %v1279 = vrcp.pop %v1263
        %vm1280 = vcmp.ge.f32.partialorder %v1122, 0.0
        %vm1281 = vcmp.ge.f32.partialorder %v1125, 0.0
        %vm1282 = vcmp.ge.f32.partialorder %v1130, 0.0
        %vm1283 = vcmp.ge.f32.partialorder %v1133, 0.0
        %vm1284 = vcmp.ge.f32.partialorder %v1138, 0.0
        %vm1285 = vcmp.ge.f32.partialorder %v1141, 0.0
        %vm1286 = vcmp.ge.f32.partialorder %v1146, 0.0
        %vm1287 = vcmp.ge.f32.partialorder %v1149, 0.0
        %vm1288 = vcmp.ge.f32.partialorder %v1154, 0.0
        %vm1289 = vcmp.ge.f32.partialorder %v1157, 0.0
        %vm1290 = vcmp.ge.f32.partialorder %v1162, 0.0
        %vm1291 = vcmp.ge.f32.partialorder %v1165, 0.0
        %vm1292 = vcmp.ge.f32.partialorder %v1170, 0.0
        %vm1293 = vcmp.ge.f32.partialorder %v1173, 0.0
        %vm1294 = vcmp.ge.f32.partialorder %v1178, 0.0
        %vm1295 = vcmp.ge.f32.partialorder %v1181, 0.0
        %v1296 = vmul.f32 %v1217, %v1264
        %v1297 = vmul.f32 %v1219, %v1265
        %v1298 = vmul.f32 %v1221, %v1266
        %v1299 = vmul.f32 %v1223, %v1267
        %v1300 = vmul.f32 %v1225, %v1268
        %v1301 = vmul.f32 %v1227, %v1269
        %v1302 = vmul.f32 %v1229, %v1270
        %v1303 = vmul.f32 %v1231, %v1271
        %v1304 = vmul.f32 %v1233, %v1272
        %v1305 = vmul.f32 %v1235, %v1273
        %v1306 = vmul.f32 %v1237, %v1274
        %v1307 = vmul.f32 %v1239, %v1275
        %v1308 = vmul.f32 %v1241, %v1276
        %v1309 = vmul.f32 %v1243, %v1277
        %v1310 = vmul.f32 %v1245, %v1278
        %v1311 = vmul.f32 %v1247, %v1279
        %v1312 = vsel %vm1280, %v1264, %v1296
        %v1313 = vsel %vm1281, %v1265, %v1297
        %v1314 = vsel %vm1282, %v1266, %v1298
        %v1315 = vsel %vm1283, %v1267, %v1299
        %v1316 = vsel %vm1284, %v1268, %v1300
        %v1317 = vsel %vm1285, %v1269, %v1301
        %v1318 = vsel %vm1286, %v1270, %v1302
        %v1319 = vsel %vm1287, %v1271, %v1303
        %v1320 = vsel %vm1288, %v1272, %v1304
        %v1321 = vsel %vm1289, %v1273, %v1305
        %v1322 = vsel %vm1290, %v1274, %v1306
        %v1323 = vsel %vm1291, %v1275, %v1307
        %v1324 = vsel %vm1292, %v1276, %v1308
        %v1325 = vsel %vm1293, %v1277, %v1309
        %v1326 = vsel %vm1294, %v1278, %v1310
        %v1327 = vsel %vm1295, %v1279, %v1311
        %v1328 = vld [vmem:[%s7] sm:$0x1]
        %v1329 = vpack.c.bf16 %v1313, %v1312
        %v1330 = vpack.c.bf16 %v1315, %v1314
        %v1331 = vpack.c.bf16 %v1317, %v1316
        %v1332 = vpack.c.bf16 %v1319, %v1318
        %v1333 = vpack.c.bf16 %v1321, %v1320
        %v1334 = vpack.c.bf16 %v1323, %v1322
        %v1335 = vpack.c.bf16 %v1325, %v1324
        %v1336 = vpack.c.bf16 %v1327, %v1326
        %v1337 = vld [vmem:[#allocation2] sm:$0x1]
        %1339 = vset.pattern.permute.xlu0 0
        %1340 = vperm.xlu0 %1339, %v1337
        %v1341 = vpop.permute.xlu0 %1340
        %v1343 = vlaneseq
        %v1344 = vshrl.u32 %v1343, 7
        %v1345 = vsub.s32 0, %v1344
        %v1346 = vrot.slane %v1341, %v1345
        %v1348 = vsel %vm742, %v1328, 0
        %v1351 = vsel %vm742, %v1329, 0
        %v1354 = vsel %vm742, %v1330, 0
        %v1357 = vsel %vm742, %v1331, 0
        %v1360 = vsel %vm742, %v1332, 0
        %v1363 = vsel %vm742, %v1333, 0
        %v1366 = vsel %vm742, %v1334, 0
        %v1369 = vsel %vm742, %v1335, 0
        %v1372 = vsel %vm742, %v1336, 0
        %1374 = vmatprep.subr.bf16.mxu0 0
        %1375 = vmatpush1.bf16.xpose.msra.mxu0 %v1351
        %1376 = vmatprep.subr.bf16.mxu0 0
        %1377 = vmatpush1.bf16.xpose.msra.mxu0 %v1354
        %1378 = vmatprep.subr.bf16.mxu0 0
        %1379 = vmatpush1.bf16.xpose.msra.mxu0 %v1357
        %1380 = vmatprep.subr.bf16.mxu0 0
        %1381 = vmatpush1.bf16.xpose.msra.mxu0 %v1360
        %1382 = vmatprep.subr.bf16.mxu0 0
        %1383 = vmatpush1.bf16.xpose.msra.mxu0 %v1363
        %1384 = vmatprep.subr.bf16.mxu0 0
        %1385 = vmatpush1.bf16.xpose.msra.mxu0 %v1366
        %1386 = vmatprep.subr.bf16.mxu0 0
        %1387 = vmatpush1.bf16.xpose.msra.mxu0 %v1369
        %1388 = vmatprep.subr.bf16.mxu0 0
        %1389 = vmatpush1.bf16.xpose.msra.mxu0 %v1372
        %1390 = vmatprep.subr.bf16.mxu0 0
        %1391 = vmatpush1.bf16.xpose.msra.mxu0 0
        %1392 = vmatprep.subr.bf16.mxu0 0
        %1393 = vmatpush1.bf16.xpose.msra.mxu0 0
        %1394 = vmatprep.subr.bf16.mxu0 0
        %1395 = vmatpush1.bf16.xpose.msra.mxu0 0
        %1396 = vmatprep.subr.bf16.mxu0 0
        %1397 = vmatpush1.bf16.xpose.msra.mxu0 0
        %1398 = vmatprep.subr.bf16.mxu0 0
        %1399 = vmatpush1.bf16.xpose.msra.mxu0 0
        %1400 = vmatprep.subr.bf16.mxu0 0
        %1401 = vmatpush1.bf16.xpose.msra.mxu0 0
        %1402 = vmatprep.subr.bf16.mxu0 0
        %1403 = vmatpush1.bf16.xpose.msra.mxu0 0
        %1404 = vmatprep.subr.bf16.mxu0 0
        %1405 = vmatpush1.bf16.xpose.msra.mxu0 0
        %1406 = vmatprep.mubr.bf16.mxu0 0
        %1407 = vmatmul.mubr.bf16.gmra.mrb[0].mxu0 %v1348
        %v1408 = vpop.f32.mrb[0].mxu0
        %v1409 = vadd.f32 %v1346, %v1408
        %v1410 = vpop.f32.mrb[0].mxu0
        %v1411 = vpop.f32.mrb[0].mxu0
        %v1412 = vpop.f32.mrb[0].mxu0
        %1413 = vdwg.mxu0
        %v1414 = vand.u32 2147483647, %v1409
        %v1415 = vsub.f32 0.0, %v1414
        %v1416 = vmul.f32 %v1415, 1.442695
        %v1417 = vpow.pop %v1416
        %v1418 = vadd.f32 %v1417, 1.0
        %v1419 = vrcp.pop %v1418
        %vm1420 = vcmp.ge.f32.partialorder %v1409, 0.0
        %v1421 = vmul.f32 %v1417, %v1419
        %v1422 = vsel %vm1420, %v1419, %v1421
        %1423 = vst [vmem:[%s327] sm:$0x1] %v1422
        %s1424 = sand.u32 %s227, 1
        %s1425 = scalar_lea.sflag [#allocation4], %s1424
        %s1426 = sand.u32 %s227, 1
        %s1427 = scalar_lea.vmem [#allocation3], %s1426
        // Predicated region
        $region57: #{pada_discriminator_forward.1} parent=55 // pred_check
          %p1428 = pneg %p237
        $region58: #{pada_discriminator_forward.1} parent=55 // pred_check_branch
          %1430 = sbr.rel (%p1428) target = $region60
        $region59: #{pada_discriminator_forward.1} parent=55 // pred_region
          %s1432 = ssub.s32 16, 16
          %1433 = vsyncadd %s1425, %s1432
          %s1434 = smul.addr %s25, 16
          %s1435 = scalar_lea.hbm %s9, %s1434
          %s1437 = sshll.u32 %s1427, 4
          %s1438 = int_to_ptr.vmem [resolvable:$true] %s1437
          %1440 = dma.vmem_to_hbm [thread:$0]  %s1438, 16, %s1435, %s1425
        $region60: #{pada_discriminator_forward.1} parent=55 // pred_fallthru
          _
      $region56: #{pada_discriminator_forward.1} parent=5 // pred_fallthru
        _
      %p1441 = scmp.le.s32.totalorder 2, %s20
      // Predicated region
      $region61: #{pada_discriminator_forward.1} parent=5 // pred_check
        %p1442 = pneg %p1441
      $region62: #{pada_discriminator_forward.1} parent=5 // pred_check_branch
        %1444 = sbr.rel (%p1442) target = $region64
      $region63: #{pada_discriminator_forward.1} parent=5 // pred_region
        %s1445 = ssub.s32 %s20, 2
        // Predicated region
        $region65: #{pada_discriminator_forward.1} parent=63 // pred_check
          %p1446 = pneg %p243
        $region66: #{pada_discriminator_forward.1} parent=63 // pred_check_branch
          %1448 = sbr.rel (%p1446) target = $region68
        $region67: #{pada_discriminator_forward.1} parent=63 // pred_region
          %s1449 = sand.u32 %s228, 1
          %s1450 = scalar_lea.sflag [#allocation4], %s1449
          %s1451 = sand.u32 %s228, 1
          %s1452 = scalar_lea.vmem [#allocation3], %s1451
          %1453 = dma.done %s1450, 16
        $region68: #{pada_discriminator_forward.1} parent=63 // pred_fallthru
          _
      $region64: #{pada_discriminator_forward.1} parent=5 // pred_fallthru
        _
    $region6: #{pada_discriminator_forward.1} parent=1 // loop_footer
      %s24 = sadd.s32 1, %s20
    $region7: #{pada_discriminator_forward.1} parent=1 // loop_footer_branch
      %19 = sbr.rel target = $region3
    $region8: #{pada_discriminator_forward.1} parent=1 // loop_exit
      _
    %1454 = vsyncpa [#allocation4], 1
    %s1455 = scalar_lea.sflag [#allocation4], 1
    %1456 = vsyncpa %s1455, 1

</llo_original>
